<compile_context>
chip_gen: v6e
topology: v6e:2x2x1
jax: 0.10.0
libtpu: 0.0.40
codegen_flags: <defaults>
</compile_context>

<pallas_src>
import math
from functools import partial

import jax
import jax.numpy as jnp
from jax.experimental import pallas as pl
from jax.experimental.pallas import tpu as pltpu


# ----------------------------------------------------------------------------
# Pallas kernel: depthwise KxK conv (stride 1) + fused epilogue
# ----------------------------------------------------------------------------
def _make_dwconv_kernel(k, rows, cols, leaky_slope, has_shift, has_residual):
    """Block shapes seen by the kernel:
         x_ref : (1, rows + k - 1, cols + k - 1, C)   halo'd input row tile
         w_ref : (k*k, 1, 1, C)                       per-channel taps
         s_ref : (1, 1, C)                            per-channel scale
         t_ref : (1, 1, C)                            optional post-scale shift
         r_ref : (1, rows, cols, C)                   optional residual
         o_ref : (1, rows, cols, C)
    """

    def kernel(*refs):
        it = iter(refs)
        x_ref = next(it)
        w_ref = next(it)
        s_ref = next(it)
        t_ref = next(it) if has_shift else None
        r_ref = next(it) if has_residual else None
        o_ref = next(it)

        c = o_ref.shape[-1]
        acc = jnp.zeros((rows, cols, c), jnp.float32)
        for dy in range(k):                                   # static, unrolled taps
            for dx in range(k):
                win = x_ref[0, dy:dy + rows, dx:dx + cols, :]
                acc = acc + win * w_ref[dy * k + dx]          # (1,1,C) broadcast
        if leaky_slope is not None:
            acc = jnp.where(acc >= 0.0, acc, leaky_slope * acc)
        acc = acc * s_ref[...]
        if has_shift:
            acc = acc + t_ref[...]
        if has_residual:
            acc = acc + r_ref[0]
        o_ref[0] = acc                                        # single store pass

    return kernel


def _pick_row_tile(h, row_bytes, requested):
    """Largest divisor of h that is <= requested (or <= an auto VMEM budget)."""
    if requested is None:
        budget = 4 * 1024 * 1024                              # ~4 MiB input tile
        cap = max(8, budget // max(row_bytes, 1))
    else:
        cap = max(1, int(requested))
    cap = min(cap, h)
    for t in range(cap, 0, -1):
        if h % t == 0:
            return t
    return h


def depthwise_conv2d(x, taps, scale, shift=None, residual=None,
                     leaky_slope=None, row_tile=None):
    """Depthwise KxK conv (stride 1, 'same') with a fused epilogue.

      out = leaky(conv(x)) * scale (+ shift) (+ residual)

    x        : (N, H, W, C) float32
    taps     : (K*K, 1, 1, C)   per-channel taps, row-major (dy, dx)
    scale    : (1, 1, C)
    shift    : (1, 1, C) or None   (bias already folded through the scale)
    residual : (N, H, W, C) or None
    """
    n, h, w, c = x.shape
    kk = taps.shape[0]
    k = int(round(math.sqrt(kk)))
    assert k * k == kk and k % 2 == 1
    pad = (k - 1) // 2
    wp = w + 2 * pad

    xp = jnp.pad(x, ((0, 0), (pad, pad), (pad, pad), (0, 0)))
    tile = _pick_row_tile(h, wp * c * 4, row_tile)
    nt = h // tile
    if nt == 1:
        xt = xp                                               # (N, H+2p, Wp, C)
    else:
        # overlapped row tiles (2*pad halo); only a few % extra HBM traffic.
        xt = jnp.stack(
            [xp[:, t * tile:t * tile + tile + 2 * pad] for t in range(nt)],
            axis=1).reshape(n * nt, tile + 2 * pad, wp, c)

    in_specs = [
        pl.BlockSpec((1, tile + 2 * pad, wp, c),
                     lambda b, t: (b * nt + t, 0, 0, 0)),
        pl.BlockSpec((kk, 1, 1, c), lambda b, t: (0, 0, 0, 0)),
        pl.BlockSpec((1, 1, c), lambda b, t: (0, 0, 0)),
    ]
    args = [xt, taps, scale]
    if shift is not None:
        in_specs.append(pl.BlockSpec((1, 1, c), lambda b, t: (0, 0, 0)))
        args.append(shift)
    if residual is not None:
        in_specs.append(pl.BlockSpec((1, tile, w, c), lambda b, t: (b, t, 0, 0)))
        args.append(residual)

    kernel = _make_dwconv_kernel(k, tile, w, leaky_slope,
                                 shift is not None, residual is not None)

    flops = 2 * n * h * w * c * kk
    bytes_accessed = 4 * (xt.size + taps.size + scale.size + n * h * w * c
                          + (residual.size if residual is not None else 0))

    return pl.pallas_call(
        kernel,
        out_shape=jax.ShapeDtypeStruct((n, h, w, c), jnp.float32),
        grid=(n, nt),
        in_specs=in_specs,
        out_specs=pl.BlockSpec((1, tile, w, c), lambda b, t: (b, t, 0, 0)),
        compiler_params=pltpu.CompilerParams(
            dimension_semantics=("parallel", "parallel"),
            vmem_limit_bytes=48 * 1024 * 1024),
        cost_estimate=pl.CostEstimate(flops=flops, transcendentals=0,
                                      bytes_accessed=bytes_accessed),
    )(*args)


# ----------------------------------------------------------------------------
# Haar (db1) analysis / synthesis — cheap XLA glue (pure data re-organisation).
# Sub-band channel layout is sub-band-major: channel index = s * C + c (a fixed
# permutation of PyTorch's c * 4 + s layout; the per-channel conv weights and
# scales below use the same layout, so the computation is identical).
# ----------------------------------------------------------------------------
def _haar_subbands(x):
    """x: (N, H, W, C) with H, W even  ->  (N, H//2, W//2, 4*C)."""
    a = x[:, 0::2, 0::2]
    b = x[:, 0::2, 1::2]
    c = x[:, 1::2, 0::2]
    d = x[:, 1::2, 1::2]
    s0 = 0.5 * (a + b + c + d)          # LL
    s1 = 0.5 * (a + b - c - d)
    s2 = 0.5 * (a - b + c - d)
    s3 = 0.5 * (a - b - c + d)
    return jnp.concatenate([s0, s1, s2, s3], axis=-1)


def _haar_inverse(t0, t1, t2, t3):
    """Per-channel inverse Haar; each input (N, Hh, Wh, C) -> (N, 2Hh, 2Wh, C)."""
    pa = 0.5 * (t0 + t1 + t2 + t3)
    pb = 0.5 * (t0 + t1 - t2 - t3)
    pc = 0.5 * (t0 - t1 + t2 - t3)
    pd = 0.5 * (t0 - t1 - t2 + t3)
    n, hh, wh, c = t0.shape
    top = jnp.stack([pa, pb], axis=3)                 # (N, Hh, Wh, 2, C)
    bot = jnp.stack([pc, pd], axis=3)
    full = jnp.stack([top, bot], axis=2)              # (N, Hh, 2, Wh, 2, C)
    return full.reshape(n, 2 * hh, 2 * wh, c)


# ----------------------------------------------------------------------------
# WTConv2d forward
# ----------------------------------------------------------------------------
def wtconv2d_forward(params, x_nchw, *, wt_levels=1, stride=1, row_tile=None):
    """Returns (y_nchw, edge_info0) matching WTConv2d.forward."""
    assert wt_levels >= 1
    x = jnp.transpose(x_nchw, (0, 2, 3, 1)).astype(jnp.float32)       # NHWC
    n, h, w, c = x.shape

    # ---- wavelet analysis + per-level depthwise conv / LeakyReLU / scale ----
    ll = x
    shapes, ll_tags, highs = [], [], []
    for lvl in range(wt_levels):
        shapes.append(ll.shape)
        hh, ww = ll.shape[1], ll.shape[2]
        if hh % 2 or ww % 2:
            ll = jnp.pad(ll, ((0, 0), (0, hh % 2), (0, ww % 2), (0, 0)))
        sub = _haar_subbands(ll)                                       # (N, h/2, w/2, 4C)
        tag = depthwise_conv2d(sub, params['wav_w'][lvl], params['wav_scale'][lvl],
                               leaky_slope=0.1, row_tile=row_tile)
        ll = sub[..., :c]                      # raw LL sub-band feeds the next level
        ll_tags.append(tag[..., :c])
        highs.append(tag[..., c:])

    # ---- wavelet synthesis ---------------------------------------------------
    next_ll = jnp.zeros_like(ll_tags[-1])
    for lvl in range(wt_levels - 1, -1, -1):
        t0 = ll_tags[lvl] + next_ll
        hi = highs[lvl]
        rec = _haar_inverse(t0, hi[..., :c], hi[..., c:2 * c], hi[..., 2 * c:])
        shp = shapes[lvl]
        next_ll = rec[:, :shp[1], :shp[2]]
    x_tag = next_ll                                                    # (N, H, W, C)

    # ---- base branch: depthwise conv + bias, per-channel scale, + x_tag -----
    scale = params['base_scale']                                       # (1, 1, C)
    shift = params['base_b'] * scale             # fold bias through the scale (host)
    y = depthwise_conv2d(x, params['base_w'], scale, shift=shift,
                         residual=x_tag, row_tile=row_tile)
    if stride > 1:
        y = y[:, ::stride, ::stride]             # do_stride (1x1 ones filter, stride s)

    # edge_info[0]: high-frequency sub-bands of the deepest level -> (N, C, 3, h, w)
    e = highs[-1]
    nn, eh, ew, _ = e.shape
    edge = jnp.transpose(e.reshape(nn, eh, ew, 3, c), (0, 4, 3, 1, 2))

    return jnp.transpose(y, (0, 3, 1, 2)), edge


# ----------------------------------------------------------------------------
# Parameters (random, but with the module's ScaleModule init values)
# ----------------------------------------------------------------------------
def init_wtconv_params(key, channels, kernel_size=5, wt_levels=1):
    c, kk = channels, kernel_size * kernel_size
    keys = jax.random.split(key, 2 + wt_levels)

    def nrm(k, shape, s=0.1):
        return s * jax.random.normal(k, shape, jnp.float32)

    return {
        'base_w': nrm(keys[0], (kk, 1, 1, c)),
        'base_b': nrm(keys[1], (1, 1, c)),
        'base_scale': jnp.ones((1, 1, c), jnp.float32),           # init_scale = 1.0
        'wav_w': [nrm(keys[2 + i], (kk, 1, 1, 4 * c)) for i in range(wt_levels)],
        'wav_scale': [0.1 * jnp.ones((1, 1, 4 * c), jnp.float32)  # init_scale = 0.1
                      for _ in range(wt_levels)],
    }


# ----------------------------------------------------------------------------
# Pure-lax reference for the fused depthwise conv (correctness check)
# ----------------------------------------------------------------------------
def _ref_depthwise(x, taps, scale, shift=None, residual=None, leaky_slope=None):
    n, h, w, c = x.shape
    k = int(round(math.sqrt(taps.shape[0])))
    rhs = taps.reshape(k, k, 1, c)
    y = jax.lax.conv_general_dilated(
        x, rhs, (1, 1), 'SAME',
        dimension_numbers=('NHWC', 'HWIO', 'NHWC'),
        feature_group_count=c, precision=jax.lax.Precision.HIGHEST)
    if leaky_slope is not None:
        y = jnp.where(y >= 0.0, y, leaky_slope * y)
    y = y * scale
    if shift is not None:
        y = y + shift
    if residual is not None:
        y = y + residual
    return y


# ----------------------------------------------------------------------------
if __name__ == "__main__":
    key = jax.random.PRNGKey(0)
    k_param, k_x = jax.random.split(key)

    channels, batch, height, width = 32, 2, 16, 16
    params = init_wtconv_params(k_param, channels, kernel_size=5, wt_levels=1)
    x = jax.random.normal(k_x, (batch, channels, height, width), jnp.float32)

    # sanity-check the fused Pallas depthwise conv against a lax reference
    kc = jax.random.split(jax.random.PRNGKey(1), 5)
    cx = jax.random.normal(kc[0], (batch, height, width, channels), jnp.float32)
    ct = 0.1 * jax.random.normal(kc[1], (25, 1, 1, channels), jnp.float32)
    cs = jax.random.normal(kc[2], (1, 1, channels), jnp.float32)
    csh = jax.random.normal(kc[3], (1, 1, channels), jnp.float32)
    cr = jax.random.normal(kc[4], (batch, height, width, channels), jnp.float32)
    got = depthwise_conv2d(cx, ct, cs, shift=csh, residual=cr,
                           leaky_slope=0.1, row_tile=8)
    want = _ref_depthwise(cx, ct, cs, csh, cr, 0.1)
    assert jnp.allclose(got, want, atol=1e-4, rtol=1e-4)

    # full WTConv2d forward (row_tile=8 exercises the multi-row-tile grid path)
    fwd = jax.jit(partial(wtconv2d_forward, wt_levels=1, stride=1, row_tile=8))
    y, edge = fwd(params, x)
    jax.block_until_ready((y, edge))

    assert y.shape == (batch, channels, height, width)
    assert edge.shape == (batch, channels, 3, height // 2, width // 2)
    assert bool(jnp.all(jnp.isfinite(y))) and bool(jnp.all(jnp.isfinite(edge)))
    print("KERNEL_OK")
</pallas_src>

<mosaic_0001>
module attributes {stable_mosaic.version = 11 : i64} {
  func.func @kernel(%arg0: i32, %arg1: i32, %arg2: memref<1x12x20x32xf32, #tpu.memory_space<vmem>>, %arg3: memref<25x1x1x32xf32, #tpu.memory_space<vmem>>, %arg4: memref<1x1x32xf32, #tpu.memory_space<vmem>>, %arg5: memref<1x1x32xf32, #tpu.memory_space<vmem>>, %arg6: memref<1x8x16x32xf32, #tpu.memory_space<vmem>>, %arg7: memref<1x8x16x32xf32, #tpu.memory_space<vmem>>) attributes {dimension_semantics = [#tpu.dimension_semantics<parallel>, #tpu.dimension_semantics<parallel>], iteration_bounds = array<i64: 2, 2>, scalar_prefetch = 0 : i64, scratch_operands = 0 : i64, tpu.core_type = #tpu.core_type<tc>, window_params = [{transform_indices = @transform_0, window_bounds = array<i64: 1, 12, 20, 32>}, {pipeline_mode = #tpu.pipeline_mode<synchronous>, transform_indices = @transform_1, window_bounds = array<i64: 25, 1, 1, 32>}, {pipeline_mode = #tpu.pipeline_mode<synchronous>, transform_indices = @transform_2, window_bounds = array<i64: 1, 1, 32>}, {pipeline_mode = #tpu.pipeline_mode<synchronous>, transform_indices = @transform_3, window_bounds = array<i64: 1, 1, 32>}, {transform_indices = @transform_4, window_bounds = array<i64: 1, 8, 16, 32>}, {transform_indices = @transform_5, window_bounds = array<i64: 1, 8, 16, 32>}]} {
    %cst = arith.constant 0.000000e+00 : f32
    %0 = vector.broadcast %cst : f32 to vector<8x16x32xf32>
    %c0 = arith.constant 0 : index
    %c0_0 = arith.constant 0 : index
    %c0_1 = arith.constant 0 : index
    %c0_2 = arith.constant 0 : index
    %1 = vector.load %arg2[%c0, %c0_0, %c0_1, %c0_2] : memref<1x12x20x32xf32, #tpu.memory_space<vmem>>, vector<1x8x16x32xf32>
    %2 = vector.shape_cast %1 : vector<1x8x16x32xf32> to vector<8x16x32xf32>
    %c0_3 = arith.constant 0 : index
    %c0_4 = arith.constant 0 : index
    %c0_5 = arith.constant 0 : index
    %c0_6 = arith.constant 0 : index
    %3 = vector.load %arg3[%c0_3, %c0_4, %c0_5, %c0_6] : memref<25x1x1x32xf32, #tpu.memory_space<vmem>>, vector<1x1x1x32xf32>
    %4 = vector.shape_cast %3 : vector<1x1x1x32xf32> to vector<1x1x32xf32>
    %5 = vector.broadcast %4 : vector<1x1x32xf32> to vector<8x16x32xf32>
    %6 = arith.mulf %2, %5 : vector<8x16x32xf32>
    %7 = arith.addf %0, %6 : vector<8x16x32xf32>
    %c0_7 = arith.constant 0 : index
    %c0_8 = arith.constant 0 : index
    %c1 = arith.constant 1 : index
    %c0_9 = arith.constant 0 : index
    %8 = vector.load %arg2[%c0_7, %c0_8, %c1, %c0_9] : memref<1x12x20x32xf32, #tpu.memory_space<vmem>>, vector<1x8x16x32xf32>
    %9 = vector.shape_cast %8 : vector<1x8x16x32xf32> to vector<8x16x32xf32>
    %c1_10 = arith.constant 1 : index
    %c0_11 = arith.constant 0 : index
    %c0_12 = arith.constant 0 : index
    %c0_13 = arith.constant 0 : index
    %10 = vector.load %arg3[%c1_10, %c0_11, %c0_12, %c0_13] : memref<25x1x1x32xf32, #tpu.memory_space<vmem>>, vector<1x1x1x32xf32>
    %11 = vector.shape_cast %10 : vector<1x1x1x32xf32> to vector<1x1x32xf32>
    %12 = vector.broadcast %11 : vector<1x1x32xf32> to vector<8x16x32xf32>
    %13 = arith.mulf %9, %12 : vector<8x16x32xf32>
    %14 = arith.addf %7, %13 : vector<8x16x32xf32>
    %c0_14 = arith.constant 0 : index
    %c0_15 = arith.constant 0 : index
    %c2 = arith.constant 2 : index
    %c0_16 = arith.constant 0 : index
    %15 = vector.load %arg2[%c0_14, %c0_15, %c2, %c0_16] : memref<1x12x20x32xf32, #tpu.memory_space<vmem>>, vector<1x8x16x32xf32>
    %16 = vector.shape_cast %15 : vector<1x8x16x32xf32> to vector<8x16x32xf32>
    %c2_17 = arith.constant 2 : index
    %c0_18 = arith.constant 0 : index
    %c0_19 = arith.constant 0 : index
    %c0_20 = arith.constant 0 : index
    %17 = vector.load %arg3[%c2_17, %c0_18, %c0_19, %c0_20] : memref<25x1x1x32xf32, #tpu.memory_space<vmem>>, vector<1x1x1x32xf32>
    %18 = vector.shape_cast %17 : vector<1x1x1x32xf32> to vector<1x1x32xf32>
    %19 = vector.broadcast %18 : vector<1x1x32xf32> to vector<8x16x32xf32>
    %20 = arith.mulf %16, %19 : vector<8x16x32xf32>
    %21 = arith.addf %14, %20 : vector<8x16x32xf32>
    %c0_21 = arith.constant 0 : index
    %c0_22 = arith.constant 0 : index
    %c3 = arith.constant 3 : index
    %c0_23 = arith.constant 0 : index
    %22 = vector.load %arg2[%c0_21, %c0_22, %c3, %c0_23] : memref<1x12x20x32xf32, #tpu.memory_space<vmem>>, vector<1x8x16x32xf32>
    %23 = vector.shape_cast %22 : vector<1x8x16x32xf32> to vector<8x16x32xf32>
    %c3_24 = arith.constant 3 : index
    %c0_25 = arith.constant 0 : index
    %c0_26 = arith.constant 0 : index
    %c0_27 = arith.constant 0 : index
    %24 = vector.load %arg3[%c3_24, %c0_25, %c0_26, %c0_27] : memref<25x1x1x32xf32, #tpu.memory_space<vmem>>, vector<1x1x1x32xf32>
    %25 = vector.shape_cast %24 : vector<1x1x1x32xf32> to vector<1x1x32xf32>
    %26 = vector.broadcast %25 : vector<1x1x32xf32> to vector<8x16x32xf32>
    %27 = arith.mulf %23, %26 : vector<8x16x32xf32>
    %28 = arith.addf %21, %27 : vector<8x16x32xf32>
    %c0_28 = arith.constant 0 : index
    %c0_29 = arith.constant 0 : index
    %c4 = arith.constant 4 : index
    %c0_30 = arith.constant 0 : index
    %29 = vector.load %arg2[%c0_28, %c0_29, %c4, %c0_30] : memref<1x12x20x32xf32, #tpu.memory_space<vmem>>, vector<1x8x16x32xf32>
    %30 = vector.shape_cast %29 : vector<1x8x16x32xf32> to vector<8x16x32xf32>
    %c4_31 = arith.constant 4 : index
    %c0_32 = arith.constant 0 : index
    %c0_33 = arith.constant 0 : index
    %c0_34 = arith.constant 0 : index
    %31 = vector.load %arg3[%c4_31, %c0_32, %c0_33, %c0_34] : memref<25x1x1x32xf32, #tpu.memory_space<vmem>>, vector<1x1x1x32xf32>
    %32 = vector.shape_cast %31 : vector<1x1x1x32xf32> to vector<1x1x32xf32>
    %33 = vector.broadcast %32 : vector<1x1x32xf32> to vector<8x16x32xf32>
    %34 = arith.mulf %30, %33 : vector<8x16x32xf32>
    %35 = arith.addf %28, %34 : vector<8x16x32xf32>
    %c0_35 = arith.constant 0 : index
    %c1_36 = arith.constant 1 : index
    %c0_37 = arith.constant 0 : index
    %c0_38 = arith.constant 0 : index
    %36 = vector.load %arg2[%c0_35, %c1_36, %c0_37, %c0_38] : memref<1x12x20x32xf32, #tpu.memory_space<vmem>>, vector<1x8x16x32xf32>
    %37 = vector.shape_cast %36 : vector<1x8x16x32xf32> to vector<8x16x32xf32>
    %c5 = arith.constant 5 : index
    %c0_39 = arith.constant 0 : index
    %c0_40 = arith.constant 0 : index
    %c0_41 = arith.constant 0 : index
    %38 = vector.load %arg3[%c5, %c0_39, %c0_40, %c0_41] : memref<25x1x1x32xf32, #tpu.memory_space<vmem>>, vector<1x1x1x32xf32>
    %39 = vector.shape_cast %38 : vector<1x1x1x32xf32> to vector<1x1x32xf32>
    %40 = vector.broadcast %39 : vector<1x1x32xf32> to vector<8x16x32xf32>
    %41 = arith.mulf %37, %40 : vector<8x16x32xf32>
    %42 = arith.addf %35, %41 : vector<8x16x32xf32>
    %c0_42 = arith.constant 0 : index
    %c1_43 = arith.constant 1 : index
    %c1_44 = arith.constant 1 : index
    %c0_45 = arith.constant 0 : index
    %43 = vector.load %arg2[%c0_42, %c1_43, %c1_44, %c0_45] : memref<1x12x20x32xf32, #tpu.memory_space<vmem>>, vector<1x8x16x32xf32>
    %44 = vector.shape_cast %43 : vector<1x8x16x32xf32> to vector<8x16x32xf32>
    %c6 = arith.constant 6 : index
    %c0_46 = arith.constant 0 : index
    %c0_47 = arith.constant 0 : index
    %c0_48 = arith.constant 0 : index
    %45 = vector.load %arg3[%c6, %c0_46, %c0_47, %c0_48] : memref<25x1x1x32xf32, #tpu.memory_space<vmem>>, vector<1x1x1x32xf32>
    %46 = vector.shape_cast %45 : vector<1x1x1x32xf32> to vector<1x1x32xf32>
    %47 = vector.broadcast %46 : vector<1x1x32xf32> to vector<8x16x32xf32>
    %48 = arith.mulf %44, %47 : vector<8x16x32xf32>
    %49 = arith.addf %42, %48 : vector<8x16x32xf32>
    %c0_49 = arith.constant 0 : index
    %c1_50 = arith.constant 1 : index
    %c2_51 = arith.constant 2 : index
    %c0_52 = arith.constant 0 : index
    %50 = vector.load %arg2[%c0_49, %c1_50, %c2_51, %c0_52] : memref<1x12x20x32xf32, #tpu.memory_space<vmem>>, vector<1x8x16x32xf32>
    %51 = vector.shape_cast %50 : vector<1x8x16x32xf32> to vector<8x16x32xf32>
    %c7 = arith.constant 7 : index
    %c0_53 = arith.constant 0 : index
    %c0_54 = arith.constant 0 : index
    %c0_55 = arith.constant 0 : index
    %52 = vector.load %arg3[%c7, %c0_53, %c0_54, %c0_55] : memref<25x1x1x32xf32, #tpu.memory_space<vmem>>, vector<1x1x1x32xf32>
    %53 = vector.shape_cast %52 : vector<1x1x1x32xf32> to vector<1x1x32xf32>
    %54 = vector.broadcast %53 : vector<1x1x32xf32> to vector<8x16x32xf32>
    %55 = arith.mulf %51, %54 : vector<8x16x32xf32>
    %56 = arith.addf %49, %55 : vector<8x16x32xf32>
    %c0_56 = arith.constant 0 : index
    %c1_57 = arith.constant 1 : index
    %c3_58 = arith.constant 3 : index
    %c0_59 = arith.constant 0 : index
    %57 = vector.load %arg2[%c0_56, %c1_57, %c3_58, %c0_59] : memref<1x12x20x32xf32, #tpu.memory_space<vmem>>, vector<1x8x16x32xf32>
    %58 = vector.shape_cast %57 : vector<1x8x16x32xf32> to vector<8x16x32xf32>
    %c8 = arith.constant 8 : index
    %c0_60 = arith.constant 0 : index
    %c0_61 = arith.constant 0 : index
    %c0_62 = arith.constant 0 : index
    %59 = vector.load %arg3[%c8, %c0_60, %c0_61, %c0_62] : memref<25x1x1x32xf32, #tpu.memory_space<vmem>>, vector<1x1x1x32xf32>
    %60 = vector.shape_cast %59 : vector<1x1x1x32xf32> to vector<1x1x32xf32>
    %61 = vector.broadcast %60 : vector<1x1x32xf32> to vector<8x16x32xf32>
    %62 = arith.mulf %58, %61 : vector<8x16x32xf32>
    %63 = arith.addf %56, %62 : vector<8x16x32xf32>
    %c0_63 = arith.constant 0 : index
    %c1_64 = arith.constant 1 : index
    %c4_65 = arith.constant 4 : index
    %c0_66 = arith.constant 0 : index
    %64 = vector.load %arg2[%c0_63, %c1_64, %c4_65, %c0_66] : memref<1x12x20x32xf32, #tpu.memory_space<vmem>>, vector<1x8x16x32xf32>
    %65 = vector.shape_cast %64 : vector<1x8x16x32xf32> to vector<8x16x32xf32>
    %c9 = arith.constant 9 : index
    %c0_67 = arith.constant 0 : index
    %c0_68 = arith.constant 0 : index
    %c0_69 = arith.constant 0 : index
    %66 = vector.load %arg3[%c9, %c0_67, %c0_68, %c0_69] : memref<25x1x1x32xf32, #tpu.memory_space<vmem>>, vector<1x1x1x32xf32>
    %67 = vector.shape_cast %66 : vector<1x1x1x32xf32> to vector<1x1x32xf32>
    %68 = vector.broadcast %67 : vector<1x1x32xf32> to vector<8x16x32xf32>
    %69 = arith.mulf %65, %68 : vector<8x16x32xf32>
    %70 = arith.addf %63, %69 : vector<8x16x32xf32>
    %c0_70 = arith.constant 0 : index
    %c2_71 = arith.constant 2 : index
    %c0_72 = arith.constant 0 : index
    %c0_73 = arith.constant 0 : index
    %71 = vector.load %arg2[%c0_70, %c2_71, %c0_72, %c0_73] : memref<1x12x20x32xf32, #tpu.memory_space<vmem>>, vector<1x8x16x32xf32>
    %72 = vector.shape_cast %71 : vector<1x8x16x32xf32> to vector<8x16x32xf32>
    %c10 = arith.constant 10 : index
    %c0_74 = arith.constant 0 : index
    %c0_75 = arith.constant 0 : index
    %c0_76 = arith.constant 0 : index
    %73 = vector.load %arg3[%c10, %c0_74, %c0_75, %c0_76] : memref<25x1x1x32xf32, #tpu.memory_space<vmem>>, vector<1x1x1x32xf32>
    %74 = vector.shape_cast %73 : vector<1x1x1x32xf32> to vector<1x1x32xf32>
    %75 = vector.broadcast %74 : vector<1x1x32xf32> to vector<8x16x32xf32>
    %76 = arith.mulf %72, %75 : vector<8x16x32xf32>
    %77 = arith.addf %70, %76 : vector<8x16x32xf32>
    %c0_77 = arith.constant 0 : index
    %c2_78 = arith.constant 2 : index
    %c1_79 = arith.constant 1 : index
    %c0_80 = arith.constant 0 : index
    %78 = vector.load %arg2[%c0_77, %c2_78, %c1_79, %c0_80] : memref<1x12x20x32xf32, #tpu.memory_space<vmem>>, vector<1x8x16x32xf32>
    %79 = vector.shape_cast %78 : vector<1x8x16x32xf32> to vector<8x16x32xf32>
    %c11 = arith.constant 11 : index
    %c0_81 = arith.constant 0 : index
    %c0_82 = arith.constant 0 : index
    %c0_83 = arith.constant 0 : index
    %80 = vector.load %arg3[%c11, %c0_81, %c0_82, %c0_83] : memref<25x1x1x32xf32, #tpu.memory_space<vmem>>, vector<1x1x1x32xf32>
    %81 = vector.shape_cast %80 : vector<1x1x1x32xf32> to vector<1x1x32xf32>
    %82 = vector.broadcast %81 : vector<1x1x32xf32> to vector<8x16x32xf32>
    %83 = arith.mulf %79, %82 : vector<8x16x32xf32>
    %84 = arith.addf %77, %83 : vector<8x16x32xf32>
    %c0_84 = arith.constant 0 : index
    %c2_85 = arith.constant 2 : index
    %c2_86 = arith.constant 2 : index
    %c0_87 = arith.constant 0 : index
    %85 = vector.load %arg2[%c0_84, %c2_85, %c2_86, %c0_87] : memref<1x12x20x32xf32, #tpu.memory_space<vmem>>, vector<1x8x16x32xf32>
    %86 = vector.shape_cast %85 : vector<1x8x16x32xf32> to vector<8x16x32xf32>
    %c12 = arith.constant 12 : index
    %c0_88 = arith.constant 0 : index
    %c0_89 = arith.constant 0 : index
    %c0_90 = arith.constant 0 : index
    %87 = vector.load %arg3[%c12, %c0_88, %c0_89, %c0_90] : memref<25x1x1x32xf32, #tpu.memory_space<vmem>>, vector<1x1x1x32xf32>
    %88 = vector.shape_cast %87 : vector<1x1x1x32xf32> to vector<1x1x32xf32>
    %89 = vector.broadcast %88 : vector<1x1x32xf32> to vector<8x16x32xf32>
    %90 = arith.mulf %86, %89 : vector<8x16x32xf32>
    %91 = arith.addf %84, %90 : vector<8x16x32xf32>
    %c0_91 = arith.constant 0 : index
    %c2_92 = arith.constant 2 : index
    %c3_93 = arith.constant 3 : index
    %c0_94 = arith.constant 0 : index
    %92 = vector.load %arg2[%c0_91, %c2_92, %c3_93, %c0_94] : memref<1x12x20x32xf32, #tpu.memory_space<vmem>>, vector<1x8x16x32xf32>
    %93 = vector.shape_cast %92 : vector<1x8x16x32xf32> to vector<8x16x32xf32>
    %c13 = arith.constant 13 : index
    %c0_95 = arith.constant 0 : index
    %c0_96 = arith.constant 0 : index
    %c0_97 = arith.constant 0 : index
    %94 = vector.load %arg3[%c13, %c0_95, %c0_96, %c0_97] : memref<25x1x1x32xf32, #tpu.memory_space<vmem>>, vector<1x1x1x32xf32>
    %95 = vector.shape_cast %94 : vector<1x1x1x32xf32> to vector<1x1x32xf32>
    %96 = vector.broadcast %95 : vector<1x1x32xf32> to vector<8x16x32xf32>
    %97 = arith.mulf %93, %96 : vector<8x16x32xf32>
    %98 = arith.addf %91, %97 : vector<8x16x32xf32>
    %c0_98 = arith.constant 0 : index
    %c2_99 = arith.constant 2 : index
    %c4_100 = arith.constant 4 : index
    %c0_101 = arith.constant 0 : index
    %99 = vector.load %arg2[%c0_98, %c2_99, %c4_100, %c0_101] : memref<1x12x20x32xf32, #tpu.memory_space<vmem>>, vector<1x8x16x32xf32>
    %100 = vector.shape_cast %99 : vector<1x8x16x32xf32> to vector<8x16x32xf32>
    %c14 = arith.constant 14 : index
    %c0_102 = arith.constant 0 : index
    %c0_103 = arith.constant 0 : index
    %c0_104 = arith.constant 0 : index
    %101 = vector.load %arg3[%c14, %c0_102, %c0_103, %c0_104] : memref<25x1x1x32xf32, #tpu.memory_space<vmem>>, vector<1x1x1x32xf32>
    %102 = vector.shape_cast %101 : vector<1x1x1x32xf32> to vector<1x1x32xf32>
    %103 = vector.broadcast %102 : vector<1x1x32xf32> to vector<8x16x32xf32>
    %104 = arith.mulf %100, %103 : vector<8x16x32xf32>
    %105 = arith.addf %98, %104 : vector<8x16x32xf32>
    %c0_105 = arith.constant 0 : index
    %c3_106 = arith.constant 3 : index
    %c0_107 = arith.constant 0 : index
    %c0_108 = arith.constant 0 : index
    %106 = vector.load %arg2[%c0_105, %c3_106, %c0_107, %c0_108] : memref<1x12x20x32xf32, #tpu.memory_space<vmem>>, vector<1x8x16x32xf32>
    %107 = vector.shape_cast %106 : vector<1x8x16x32xf32> to vector<8x16x32xf32>
    %c15 = arith.constant 15 : index
    %c0_109 = arith.constant 0 : index
    %c0_110 = arith.constant 0 : index
    %c0_111 = arith.constant 0 : index
    %108 = vector.load %arg3[%c15, %c0_109, %c0_110, %c0_111] : memref<25x1x1x32xf32, #tpu.memory_space<vmem>>, vector<1x1x1x32xf32>
    %109 = vector.shape_cast %108 : vector<1x1x1x32xf32> to vector<1x1x32xf32>
    %110 = vector.broadcast %109 : vector<1x1x32xf32> to vector<8x16x32xf32>
    %111 = arith.mulf %107, %110 : vector<8x16x32xf32>
    %112 = arith.addf %105, %111 : vector<8x16x32xf32>
    %c0_112 = arith.constant 0 : index
    %c3_113 = arith.constant 3 : index
    %c1_114 = arith.constant 1 : index
    %c0_115 = arith.constant 0 : index
    %113 = vector.load %arg2[%c0_112, %c3_113, %c1_114, %c0_115] : memref<1x12x20x32xf32, #tpu.memory_space<vmem>>, vector<1x8x16x32xf32>
    %114 = vector.shape_cast %113 : vector<1x8x16x32xf32> to vector<8x16x32xf32>
    %c16 = arith.constant 16 : index
    %c0_116 = arith.constant 0 : index
    %c0_117 = arith.constant 0 : index
    %c0_118 = arith.constant 0 : index
    %115 = vector.load %arg3[%c16, %c0_116, %c0_117, %c0_118] : memref<25x1x1x32xf32, #tpu.memory_space<vmem>>, vector<1x1x1x32xf32>
    %116 = vector.shape_cast %115 : vector<1x1x1x32xf32> to vector<1x1x32xf32>
    %117 = vector.broadcast %116 : vector<1x1x32xf32> to vector<8x16x32xf32>
    %118 = arith.mulf %114, %117 : vector<8x16x32xf32>
    %119 = arith.addf %112, %118 : vector<8x16x32xf32>
    %c0_119 = arith.constant 0 : index
    %c3_120 = arith.constant 3 : index
    %c2_121 = arith.constant 2 : index
    %c0_122 = arith.constant 0 : index
    %120 = vector.load %arg2[%c0_119, %c3_120, %c2_121, %c0_122] : memref<1x12x20x32xf32, #tpu.memory_space<vmem>>, vector<1x8x16x32xf32>
    %121 = vector.shape_cast %120 : vector<1x8x16x32xf32> to vector<8x16x32xf32>
    %c17 = arith.constant 17 : index
    %c0_123 = arith.constant 0 : index
    %c0_124 = arith.constant 0 : index
    %c0_125 = arith.constant 0 : index
    %122 = vector.load %arg3[%c17, %c0_123, %c0_124, %c0_125] : memref<25x1x1x32xf32, #tpu.memory_space<vmem>>, vector<1x1x1x32xf32>
    %123 = vector.shape_cast %122 : vector<1x1x1x32xf32> to vector<1x1x32xf32>
    %124 = vector.broadcast %123 : vector<1x1x32xf32> to vector<8x16x32xf32>
    %125 = arith.mulf %121, %124 : vector<8x16x32xf32>
    %126 = arith.addf %119, %125 : vector<8x16x32xf32>
    %c0_126 = arith.constant 0 : index
    %c3_127 = arith.constant 3 : index
    %c3_128 = arith.constant 3 : index
    %c0_129 = arith.constant 0 : index
    %127 = vector.load %arg2[%c0_126, %c3_127, %c3_128, %c0_129] : memref<1x12x20x32xf32, #tpu.memory_space<vmem>>, vector<1x8x16x32xf32>
    %128 = vector.shape_cast %127 : vector<1x8x16x32xf32> to vector<8x16x32xf32>
    %c18 = arith.constant 18 : index
    %c0_130 = arith.constant 0 : index
    %c0_131 = arith.constant 0 : index
    %c0_132 = arith.constant 0 : index
    %129 = vector.load %arg3[%c18, %c0_130, %c0_131, %c0_132] : memref<25x1x1x32xf32, #tpu.memory_space<vmem>>, vector<1x1x1x32xf32>
    %130 = vector.shape_cast %129 : vector<1x1x1x32xf32> to vector<1x1x32xf32>
    %131 = vector.broadcast %130 : vector<1x1x32xf32> to vector<8x16x32xf32>
    %132 = arith.mulf %128, %131 : vector<8x16x32xf32>
    %133 = arith.addf %126, %132 : vector<8x16x32xf32>
    %c0_133 = arith.constant 0 : index
    %c3_134 = arith.constant 3 : index
    %c4_135 = arith.constant 4 : index
    %c0_136 = arith.constant 0 : index
    %134 = vector.load %arg2[%c0_133, %c3_134, %c4_135, %c0_136] : memref<1x12x20x32xf32, #tpu.memory_space<vmem>>, vector<1x8x16x32xf32>
    %135 = vector.shape_cast %134 : vector<1x8x16x32xf32> to vector<8x16x32xf32>
    %c19 = arith.constant 19 : index
    %c0_137 = arith.constant 0 : index
    %c0_138 = arith.constant 0 : index
    %c0_139 = arith.constant 0 : index
    %136 = vector.load %arg3[%c19, %c0_137, %c0_138, %c0_139] : memref<25x1x1x32xf32, #tpu.memory_space<vmem>>, vector<1x1x1x32xf32>
    %137 = vector.shape_cast %136 : vector<1x1x1x32xf32> to vector<1x1x32xf32>
    %138 = vector.broadcast %137 : vector<1x1x32xf32> to vector<8x16x32xf32>
    %139 = arith.mulf %135, %138 : vector<8x16x32xf32>
    %140 = arith.addf %133, %139 : vector<8x16x32xf32>
    %c0_140 = arith.constant 0 : index
    %c4_141 = arith.constant 4 : index
    %c0_142 = arith.constant 0 : index
    %c0_143 = arith.constant 0 : index
    %141 = vector.load %arg2[%c0_140, %c4_141, %c0_142, %c0_143] : memref<1x12x20x32xf32, #tpu.memory_space<vmem>>, vector<1x8x16x32xf32>
    %142 = vector.shape_cast %141 : vector<1x8x16x32xf32> to vector<8x16x32xf32>
    %c20 = arith.constant 20 : index
    %c0_144 = arith.constant 0 : index
    %c0_145 = arith.constant 0 : index
    %c0_146 = arith.constant 0 : index
    %143 = vector.load %arg3[%c20, %c0_144, %c0_145, %c0_146] : memref<25x1x1x32xf32, #tpu.memory_space<vmem>>, vector<1x1x1x32xf32>
    %144 = vector.shape_cast %143 : vector<1x1x1x32xf32> to vector<1x1x32xf32>
    %145 = vector.broadcast %144 : vector<1x1x32xf32> to vector<8x16x32xf32>
    %146 = arith.mulf %142, %145 : vector<8x16x32xf32>
    %147 = arith.addf %140, %146 : vector<8x16x32xf32>
    %c0_147 = arith.constant 0 : index
    %c4_148 = arith.constant 4 : index
    %c1_149 = arith.constant 1 : index
    %c0_150 = arith.constant 0 : index
    %148 = vector.load %arg2[%c0_147, %c4_148, %c1_149, %c0_150] : memref<1x12x20x32xf32, #tpu.memory_space<vmem>>, vector<1x8x16x32xf32>
    %149 = vector.shape_cast %148 : vector<1x8x16x32xf32> to vector<8x16x32xf32>
    %c21 = arith.constant 21 : index
    %c0_151 = arith.constant 0 : index
    %c0_152 = arith.constant 0 : index
    %c0_153 = arith.constant 0 : index
    %150 = vector.load %arg3[%c21, %c0_151, %c0_152, %c0_153] : memref<25x1x1x32xf32, #tpu.memory_space<vmem>>, vector<1x1x1x32xf32>
    %151 = vector.shape_cast %150 : vector<1x1x1x32xf32> to vector<1x1x32xf32>
    %152 = vector.broadcast %151 : vector<1x1x32xf32> to vector<8x16x32xf32>
    %153 = arith.mulf %149, %152 : vector<8x16x32xf32>
    %154 = arith.addf %147, %153 : vector<8x16x32xf32>
    %c0_154 = arith.constant 0 : index
    %c4_155 = arith.constant 4 : index
    %c2_156 = arith.constant 2 : index
    %c0_157 = arith.constant 0 : index
    %155 = vector.load %arg2[%c0_154, %c4_155, %c2_156, %c0_157] : memref<1x12x20x32xf32, #tpu.memory_space<vmem>>, vector<1x8x16x32xf32>
    %156 = vector.shape_cast %155 : vector<1x8x16x32xf32> to vector<8x16x32xf32>
    %c22 = arith.constant 22 : index
    %c0_158 = arith.constant 0 : index
    %c0_159 = arith.constant 0 : index
    %c0_160 = arith.constant 0 : index
    %157 = vector.load %arg3[%c22, %c0_158, %c0_159, %c0_160] : memref<25x1x1x32xf32, #tpu.memory_space<vmem>>, vector<1x1x1x32xf32>
    %158 = vector.shape_cast %157 : vector<1x1x1x32xf32> to vector<1x1x32xf32>
    %159 = vector.broadcast %158 : vector<1x1x32xf32> to vector<8x16x32xf32>
    %160 = arith.mulf %156, %159 : vector<8x16x32xf32>
    %161 = arith.addf %154, %160 : vector<8x16x32xf32>
    %c0_161 = arith.constant 0 : index
    %c4_162 = arith.constant 4 : index
    %c3_163 = arith.constant 3 : index
    %c0_164 = arith.constant 0 : index
    %162 = vector.load %arg2[%c0_161, %c4_162, %c3_163, %c0_164] : memref<1x12x20x32xf32, #tpu.memory_space<vmem>>, vector<1x8x16x32xf32>
    %163 = vector.shape_cast %162 : vector<1x8x16x32xf32> to vector<8x16x32xf32>
    %c23 = arith.constant 23 : index
    %c0_165 = arith.constant 0 : index
    %c0_166 = arith.constant 0 : index
    %c0_167 = arith.constant 0 : index
    %164 = vector.load %arg3[%c23, %c0_165, %c0_166, %c0_167] : memref<25x1x1x32xf32, #tpu.memory_space<vmem>>, vector<1x1x1x32xf32>
    %165 = vector.shape_cast %164 : vector<1x1x1x32xf32> to vector<1x1x32xf32>
    %166 = vector.broadcast %165 : vector<1x1x32xf32> to vector<8x16x32xf32>
    %167 = arith.mulf %163, %166 : vector<8x16x32xf32>
    %168 = arith.addf %161, %167 : vector<8x16x32xf32>
    %c0_168 = arith.constant 0 : index
    %c4_169 = arith.constant 4 : index
    %c4_170 = arith.constant 4 : index
    %c0_171 = arith.constant 0 : index
    %169 = vector.load %arg2[%c0_168, %c4_169, %c4_170, %c0_171] : memref<1x12x20x32xf32, #tpu.memory_space<vmem>>, vector<1x8x16x32xf32>
    %170 = vector.shape_cast %169 : vector<1x8x16x32xf32> to vector<8x16x32xf32>
    %c24 = arith.constant 24 : index
    %c0_172 = arith.constant 0 : index
    %c0_173 = arith.constant 0 : index
    %c0_174 = arith.constant 0 : index
    %171 = vector.load %arg3[%c24, %c0_172, %c0_173, %c0_174] : memref<25x1x1x32xf32, #tpu.memory_space<vmem>>, vector<1x1x1x32xf32>
    %172 = vector.shape_cast %171 : vector<1x1x1x32xf32> to vector<1x1x32xf32>
    %173 = vector.broadcast %172 : vector<1x1x32xf32> to vector<8x16x32xf32>
    %174 = arith.mulf %170, %173 : vector<8x16x32xf32>
    %175 = arith.addf %168, %174 : vector<8x16x32xf32>
    %cst_175 = arith.constant 0.000000e+00 : f32
    %176 = vector.broadcast %cst_175 : f32 to vector<8x16x32xf32>
    %177 = arith.cmpf oge, %175, %176 : vector<8x16x32xf32>
    %cst_176 = arith.constant 1.000000e-01 : f32
    %178 = vector.broadcast %cst_176 : f32 to vector<8x16x32xf32>
    %179 = arith.mulf %178, %175 : vector<8x16x32xf32>
    %180 = arith.select %177, %175, %179 : vector<8x16x32xi1>, vector<8x16x32xf32>
    %c0_177 = arith.constant 0 : index
    %c0_178 = arith.constant 0 : index
    %c0_179 = arith.constant 0 : index
    %181 = vector.load %arg4[%c0_177, %c0_178, %c0_179] : memref<1x1x32xf32, #tpu.memory_space<vmem>>, vector<1x1x32xf32>
    %182 = vector.broadcast %181 : vector<1x1x32xf32> to vector<8x16x32xf32>
    %183 = arith.mulf %180, %182 : vector<8x16x32xf32>
    %c0_180 = arith.constant 0 : index
    %c0_181 = arith.constant 0 : index
    %c0_182 = arith.constant 0 : index
    %184 = vector.load %arg5[%c0_180, %c0_181, %c0_182] : memref<1x1x32xf32, #tpu.memory_space<vmem>>, vector<1x1x32xf32>
    %185 = vector.broadcast %184 : vector<1x1x32xf32> to vector<8x16x32xf32>
    %186 = arith.addf %183, %185 : vector<8x16x32xf32>
    %c0_183 = arith.constant 0 : index
    %c0_184 = arith.constant 0 : index
    %c0_185 = arith.constant 0 : index
    %c0_186 = arith.constant 0 : index
    %187 = vector.load %arg6[%c0_183, %c0_184, %c0_185, %c0_186] : memref<1x8x16x32xf32, #tpu.memory_space<vmem>>, vector<1x8x16x32xf32>
    %188 = vector.shape_cast %187 : vector<1x8x16x32xf32> to vector<8x16x32xf32>
    %189 = arith.addf %186, %188 : vector<8x16x32xf32>
    %c0_187 = arith.constant 0 : index
    %c0_188 = arith.constant 0 : index
    %c0_189 = arith.constant 0 : index
    %c0_190 = arith.constant 0 : index
    %190 = vector.load %arg7[%c0_187, %c0_188, %c0_189, %c0_190] : memref<1x8x16x32xf32, #tpu.memory_space<vmem>>, vector<1x8x16x32xf32>
    %191 = vector.shape_cast %190 : vector<1x8x16x32xf32> to vector<8x16x32xf32>
    %192 = vector.shape_cast %189 : vector<8x16x32xf32> to vector<1x8x16x32xf32>
    tpu.vector_store %arg7[%c0_187, %c0_188, %c0_189, %c0_190], %192 {strides = array<i32>} : memref<1x8x16x32xf32, #tpu.memory_space<vmem>>, vector<1x8x16x32xf32>,
    return
  }
  func.func @transform_0(%arg0: i32, %arg1: i32) -> (i32, i32, i32, i32) {
    %c2_i32 = arith.constant 2 : i32
    %0 = arith.muli %arg0, %c2_i32 : i32
    %1 = arith.addi %0, %arg1 : i32
    %c0_i32 = arith.constant 0 : i32
    %c0_i32_0 = arith.constant 0 : i32
    %c0_i32_1 = arith.constant 0 : i32
    %c0_i32_2 = arith.constant 0 : i32
    return %1, %c0_i32, %c0_i32_0, %c0_i32_1 : i32, i32, i32, i32
  }
  func.func @transform_1(%arg0: i32, %arg1: i32) -> (i32, i32, i32, i32) {
    %c0_i32 = arith.constant 0 : i32
    %c0_i32_0 = arith.constant 0 : i32
    %c0_i32_1 = arith.constant 0 : i32
    %c0_i32_2 = arith.constant 0 : i32
    %c0_i32_3 = arith.constant 0 : i32
    return %c0_i32, %c0_i32_0, %c0_i32_1, %c0_i32_2 : i32, i32, i32, i32
  }
  func.func @transform_2(%arg0: i32, %arg1: i32) -> (i32, i32, i32) {
    %c0_i32 = arith.constant 0 : i32
    %c0_i32_0 = arith.constant 0 : i32
    %c0_i32_1 = arith.constant 0 : i32
    %c0_i32_2 = arith.constant 0 : i32
    return %c0_i32, %c0_i32_0, %c0_i32_1 : i32, i32, i32
  }
  func.func @transform_3(%arg0: i32, %arg1: i32) -> (i32, i32, i32) {
    %c0_i32 = arith.constant 0 : i32
    %c0_i32_0 = arith.constant 0 : i32
    %c0_i32_1 = arith.constant 0 : i32
    %c0_i32_2 = arith.constant 0 : i32
    return %c0_i32, %c0_i32_0, %c0_i32_1 : i32, i32, i32
  }
  func.func @transform_4(%arg0: i32, %arg1: i32) -> (i32, i32, i32, i32) {
    %c0_i32 = arith.constant 0 : i32
    %c0_i32_0 = arith.constant 0 : i32
    %c0_i32_1 = arith.constant 0 : i32
    return %arg0, %arg1, %c0_i32, %c0_i32_0 : i32, i32, i32, i32
  }
  func.func @transform_5(%arg0: i32, %arg1: i32) -> (i32, i32, i32, i32) {
    %c0_i32 = arith.constant 0 : i32
    %c0_i32_0 = arith.constant 0 : i32
    %c0_i32_1 = arith.constant 0 : i32
    return %arg0, %arg1, %c0_i32, %c0_i32_0 : i32, i32, i32, i32
  }
}

</mosaic_0001>

<llo_original>
// kernel: tpu_custom_call.1
$region0: #{tpu_custom_call.1}
  #allocation0 [shape = 'u32[]', space=smem, size = 0x4, offset = 0x4, fixed_abs, tag = 'smem constant byte address 0x4 - core index']
  #allocation1 [shape = 'u32[144,128]{1,0:T(1,128)}', space=vmem, size = 0x12000, scoped, tag = 'internal scratch']
  %s0 = inlined_call_operand.vmem [shape: f32[4,12,20,32], index: 0, kind: input, shape index: {}]
  %s1 = inlined_call_operand.vmem [shape: f32[25,1,1,32], index: 1, kind: input, shape index: {}]
  %s2 = inlined_call_operand.vmem [shape: f32[1,1,32], index: 2, kind: input, shape index: {}]
  %s3 = inlined_call_operand.vmem [shape: f32[1,1,32], index: 3, kind: input, shape index: {}]
  %s4 = inlined_call_operand.vmem [shape: f32[2,16,16,32], index: 4, kind: input, shape index: {}]
  %s5 = inlined_call_operand.hbm [shape: f32[2,16,16,32], index: 5, kind: output, shape index: {}]
  %s6 = sld [smem:[#allocation0]]
  $region53: #{tpu_custom_call.1} parent=0
    _
  %s8 = ssub.s32 1, %s6
  %s9 = scalar_select 0, %s8, %s6
  $region1: #{tpu_custom_call.1} parent=0
    #allocation2 [shape = 'u8[131072]{0}', space=vmem, size = 0x20000, scoped, tag = 'output window, operand 0']
    #allocation3 [shape = 's32[2]{0}', space=sflag, size = 0x8, scoped, tag = 'scoped memory for tpu_custom_call.1']
    %10 = vsyncpa [#allocation3], 0
    %s11 = scalar_lea.sflag [#allocation3], 1
    %12 = vsyncpa %s11, 0
    loop: start=0, step=1, limit=6
    $region2: #{tpu_custom_call.1} parent=1 // loop_pre_header
      _
    $region3: #{tpu_custom_call.1} parent=1 // loop_header
      %s14 = sphi 0, %s18
      %p15 = scmp.ge.s32.totalorder %s14, 6
      %s21 = sphi 0, %s33
      %s22 = sphi 0, %s29
      %s23 = sphi 0, %s21
      %s24 = sphi 0, %s22
      %s25 = sphi 0, %s23
      %s26 = sphi 0, %s24
      %s40 = sphi 0, %s42
      %s43 = sphi 0, %s40
      %s44 = sphi 0, %s43
      %s60 = sphi 0, %s44
      %s64 = sphi 0, %s64
      %s66 = sphi 0, %s64
      %s67 = sphi 0, %s66
      %s81 = sphi 0, %s67
      %s85 = sphi 0, %s85
      %s87 = sphi 0, %s85
      %s88 = sphi 0, %s87
      %s102 = sphi 0, %s88
      %s106 = sphi 0, %s106
      %s108 = sphi 0, %s106
      %s109 = sphi 0, %s108
      %s123 = sphi 0, %s109
      %s131 = sphi 0, %s133
      %s134 = sphi 0, %s131
      %s135 = sphi 0, %s134
      %s151 = sphi 0, %s135
      %s159 = sphi 0, %s161
      %s162 = sphi 0, %s159
      %s163 = sphi 0, %s162
      %s179 = sphi 0, %s163
    $region4: #{tpu_custom_call.1} parent=1 // loop_header_branch
      %17 = sbr.rel (%p15) target = $region8
    $region5: #{tpu_custom_call.1} parent=1 // loop_body
      %s19 = ssub.s32 %s14, 1
      %s20 = ssub.s32 %s14, 2
      %s27 = sadd.s32 1, %s22
      %p28 = scmp.ge.s32.totalorder %s27, 2
      %s29 = scalar_select %p28, 0, %s27
      %s30 = sadd.s32 1, %s21
      %s31 = scalar_select %p28, %s30, %s21
      %p32 = scmp.ge.s32.totalorder %s31, 2
      %s33 = scalar_select %p32, 0, %s31
      %s34 = smul.u32 %s21, 2
      %s35 = sadd.s32 %s34, %s22
      %s36 = smul.u32 %s33, 2
      %s37 = sadd.s32 %s36, %s29
      %s38 = ssub.s32 %s35, %s37
      %p39 = scmp.eq.s32.totalorder %s38, 0
      %s41 = sadd.s32 %s40, 1
      %s42 = scalar_select %p39, %s40, %s41
      %p45 = pneg %p39
      %p46 = scmp.eq.s32.totalorder %s14, 3
      %p47 = por %p45, %p46
      %p48 = scmp.ne.s32.totalorder %s40, %s43
      %p49 = scmp.eq.s32.totalorder %s14, 0
      %p50 = por %p48, %p49
      %p51 = scmp.ne.s32.totalorder %s40, %s43
      %p52 = scmp.eq.s32.totalorder %s19, 3
      %p53 = por %p51, %p52
      %p54 = scmp.ne.s32.totalorder %s43, %s44
      %p55 = scmp.eq.s32.totalorder %s19, 0
      %p56 = por %p54, %p55
      %p57 = scmp.ne.s32.totalorder %s43, %s44
      %p58 = scmp.eq.s32.totalorder %s20, 3
      %p59 = por %p57, %p58
      %p61 = scmp.ne.s32.totalorder %s44, %s60
      %p62 = scmp.eq.s32.totalorder %s20, 0
      %p63 = por %p61, %p62
      %s65 = sadd.s32 %s64, 1
      %p68 = scmp.eq.s32.totalorder %s14, 3
      %p69 = scmp.ne.s32.totalorder %s64, %s66
      %p70 = scmp.eq.s32.totalorder %s14, 0
      %p71 = por %p69, %p70
      %p72 = scmp.ne.s32.totalorder %s64, %s66
      %p73 = scmp.eq.s32.totalorder %s19, 3
      %p74 = por %p72, %p73
      %p75 = scmp.ne.s32.totalorder %s66, %s67
      %p76 = scmp.eq.s32.totalorder %s19, 0
      %p77 = por %p75, %p76
      %p78 = scmp.ne.s32.totalorder %s66, %s67
      %p79 = scmp.eq.s32.totalorder %s20, 3
      %p80 = por %p78, %p79
      %p82 = scmp.ne.s32.totalorder %s67, %s81
      %p83 = scmp.eq.s32.totalorder %s20, 0
      %p84 = por %p82, %p83
      %s86 = sadd.s32 %s85, 1
      %p89 = scmp.eq.s32.totalorder %s14, 3
      %p90 = scmp.ne.s32.totalorder %s85, %s87
      %p91 = scmp.eq.s32.totalorder %s14, 0
      %p92 = por %p90, %p91
      %p93 = scmp.ne.s32.totalorder %s85, %s87
      %p94 = scmp.eq.s32.totalorder %s19, 3
      %p95 = por %p93, %p94
      %p96 = scmp.ne.s32.totalorder %s87, %s88
      %p97 = scmp.eq.s32.totalorder %s19, 0
      %p98 = por %p96, %p97
      %p99 = scmp.ne.s32.totalorder %s87, %s88
      %p100 = scmp.eq.s32.totalorder %s20, 3
      %p101 = por %p99, %p100
      %p103 = scmp.ne.s32.totalorder %s88, %s102
      %p104 = scmp.eq.s32.totalorder %s20, 0
      %p105 = por %p103, %p104
      %s107 = sadd.s32 %s106, 1
      %p110 = scmp.eq.s32.totalorder %s14, 3
      %p111 = scmp.ne.s32.totalorder %s106, %s108
      %p112 = scmp.eq.s32.totalorder %s14, 0
      %p113 = por %p111, %p112
      %p114 = scmp.ne.s32.totalorder %s106, %s108
      %p115 = scmp.eq.s32.totalorder %s19, 3
      %p116 = por %p114, %p115
      %p117 = scmp.ne.s32.totalorder %s108, %s109
      %p118 = scmp.eq.s32.totalorder %s19, 0
      %p119 = por %p117, %p118
      %p120 = scmp.ne.s32.totalorder %s108, %s109
      %p121 = scmp.eq.s32.totalorder %s20, 3
      %p122 = por %p120, %p121
      %p124 = scmp.ne.s32.totalorder %s109, %s123
      %p125 = scmp.eq.s32.totalorder %s20, 0
      %p126 = por %p124, %p125
      %s127 = ssub.s32 %s21, %s33
      %s128 = ssub.s32 %s22, %s29
      %s129 = sor.u32 %s127, %s128
      %p130 = scmp.eq.s32.totalorder %s129, 0
      %s132 = sadd.s32 %s131, 1
      %s133 = scalar_select %p130, %s131, %s132
      %p136 = pneg %p130
      %p137 = scmp.eq.s32.totalorder %s14, 3
      %p138 = por %p136, %p137
      %p139 = scmp.ne.s32.totalorder %s131, %s134
      %p140 = scmp.eq.s32.totalorder %s14, 0
      %p141 = por %p139, %p140
      %p142 = scmp.ne.s32.totalorder %s131, %s134
      %p143 = scmp.eq.s32.totalorder %s19, 3
      %p144 = por %p142, %p143
      %p145 = scmp.ne.s32.totalorder %s134, %s135
      %p146 = scmp.eq.s32.totalorder %s19, 0
      %p147 = por %p145, %p146
      %p148 = scmp.ne.s32.totalorder %s134, %s135
      %p149 = scmp.eq.s32.totalorder %s20, 3
      %p150 = por %p148, %p149
      %p152 = scmp.ne.s32.totalorder %s135, %s151
      %p153 = scmp.eq.s32.totalorder %s20, 0
      %p154 = por %p152, %p153
      %s155 = ssub.s32 %s21, %s33
      %s156 = ssub.s32 %s22, %s29
      %s157 = sor.u32 %s155, %s156
      %p158 = scmp.eq.s32.totalorder %s157, 0
      %s160 = sadd.s32 %s159, 1
      %s161 = scalar_select %p158, %s159, %s160
      %p164 = pneg %p158
      %p165 = scmp.eq.s32.totalorder %s14, 3
      %p166 = por %p164, %p165
      %p167 = scmp.ne.s32.totalorder %s159, %s162
      %p168 = scmp.eq.s32.totalorder %s14, 0
      %p169 = por %p167, %p168
      %p170 = scmp.ne.s32.totalorder %s159, %s162
      %p171 = scmp.eq.s32.totalorder %s19, 3
      %p172 = por %p170, %p171
      %p173 = scmp.ne.s32.totalorder %s162, %s163
      %p174 = scmp.eq.s32.totalorder %s19, 0
      %p175 = por %p173, %p174
      %p176 = scmp.ne.s32.totalorder %s162, %s163
      %p177 = scmp.eq.s32.totalorder %s20, 3
      %p178 = por %p176, %p177
      %p180 = scmp.ne.s32.totalorder %s163, %s179
      %p181 = scmp.eq.s32.totalorder %s20, 0
      %p182 = por %p180, %p181
      %p183 = scmp.le.s32.totalorder 1, %s14
      %p184 = scmp.lt.s32.totalorder %s14, 5
      %p185 = pnand %p183, %p184
      %p186 = pneg %p185
      // Predicated region
      $region9: #{tpu_custom_call.1} parent=5 // pred_check
        _
      $region10: #{tpu_custom_call.1} parent=5 // pred_check_branch
        %188 = sbr.rel (%p185) target = $region12
      $region11: #{tpu_custom_call.1} parent=5 // pred_region
        %s189 = ssub.s32 %s14, 1
        // Predicated region
        $region13: #{tpu_custom_call.1} parent=11 // pred_check
          %p190 = pneg %p77
        $region14: #{tpu_custom_call.1} parent=11 // pred_check_branch
          %192 = sbr.rel (%p190) target = $region16
        $region15: #{tpu_custom_call.1} parent=11 // pred_region
          _
        $region16: #{tpu_custom_call.1} parent=11 // pred_fallthru
          _
        // Predicated region
        $region17: #{tpu_custom_call.1} parent=11 // pred_check
          %p193 = pneg %p98
        $region18: #{tpu_custom_call.1} parent=11 // pred_check_branch
          %195 = sbr.rel (%p193) target = $region20
        $region19: #{tpu_custom_call.1} parent=11 // pred_region
          _
        $region20: #{tpu_custom_call.1} parent=11 // pred_fallthru
          _
        // Predicated region
        $region21: #{tpu_custom_call.1} parent=11 // pred_check
          %p196 = pneg %p119
        $region22: #{tpu_custom_call.1} parent=11 // pred_check_branch
          %198 = sbr.rel (%p196) target = $region24
        $region23: #{tpu_custom_call.1} parent=11 // pred_region
          _
        $region24: #{tpu_custom_call.1} parent=11 // pred_fallthru
          _
      $region12: #{tpu_custom_call.1} parent=5 // pred_fallthru
        _
      %p199 = scmp.lt.s32.totalorder %s14, 4
      // Predicated region
      $region25: #{tpu_custom_call.1} parent=5 // pred_check
        %p200 = pneg %p199
      $region26: #{tpu_custom_call.1} parent=5 // pred_check_branch
        %202 = sbr.rel (%p200) target = $region28
      $region27: #{tpu_custom_call.1} parent=5 // pred_region
        // Predicated region
        $region29: #{tpu_custom_call.1} parent=27 // pred_check
          %p203 = pneg %p50
        $region30: #{tpu_custom_call.1} parent=27 // pred_check_branch
          %205 = sbr.rel (%p203) target = $region32
        $region31: #{tpu_custom_call.1} parent=27 // pred_region
          %s206 = smul.u32 %s21, 2
          %s207 = sadd.s32 %s206, %s22
          %p208 = scmp.lt.s32.totalorder %s207, 3
          %s209 = scalar_select %p208, %s207, 3
          %s210 = smul.addr %s209, 36
          %s211 = smul.addr %s210, 8
          %s212 = scalar_lea.vmem %s0, %s211
          %s213 = smul.u32 %s21, 2
          %s214 = sadd.s32 %s213, %s22
        $region32: #{tpu_custom_call.1} parent=27 // pred_fallthru
          _
        // Predicated region
        $region33: #{tpu_custom_call.1} parent=27 // pred_check
          %p215 = pneg %p141
        $region34: #{tpu_custom_call.1} parent=27 // pred_check_branch
          %217 = sbr.rel (%p215) target = $region36
        $region35: #{tpu_custom_call.1} parent=27 // pred_region
          %s218 = smul.u32 8, %s22
          %p219 = scmp.lt.s32.totalorder %s21, 1
          %s220 = scalar_select %p219, %s21, 1
          %p221 = scmp.lt.s32.totalorder %s218, 15
          %s222 = scalar_select %p221, %s218, 15
          %s223 = smul.addr %s222, 2
          %s224 = smul.addr %s220, 32
          %s225 = sadd.s32 %s223, %s224
          %s226 = smul.addr %s225, 8
          %s227 = scalar_lea.vmem %s4, %s226
          %s228 = smul.u32 8, %s22
        $region36: #{tpu_custom_call.1} parent=27 // pred_fallthru
          _
      $region28: #{tpu_custom_call.1} parent=5 // pred_fallthru
        _
      %p229 = scmp.le.s32.totalorder 1, %s14
      %p230 = scmp.lt.s32.totalorder %s14, 5
      %p231 = pnand %p229, %p230
      %p232 = pneg %p231
      // Predicated region
      $region37: #{tpu_custom_call.1} parent=5 // pred_check
        _
      $region38: #{tpu_custom_call.1} parent=5 // pred_check_branch
        %234 = sbr.rel (%p231) target = $region40
      $region39: #{tpu_custom_call.1} parent=5 // pred_region
        %s235 = ssub.s32 %s14, 1
        %s236 = smul.u32 %s23, 2
        %s237 = sadd.s32 %s236, %s24
        %p238 = scmp.lt.s32.totalorder %s237, 3
        %s239 = scalar_select %p238, %s237, 3
        %s240 = smul.addr %s239, 36
        %s241 = smul.addr %s240, 8
        %s242 = scalar_lea.vmem %s0, %s241
        %p243 = pneg %p56
        %p244 = pneg %p53
        %p245 = pneg %p77
        %p246 = pneg %p74
        %p247 = pneg %p98
        %p248 = pneg %p95
        %p249 = pneg %p119
        %p250 = pneg %p116
        %s251 = smul.u32 8, %s24
        %p252 = scmp.lt.s32.totalorder %s23, 1
        %s253 = scalar_select %p252, %s23, 1
        %p254 = scmp.lt.s32.totalorder %s251, 15
        %s255 = scalar_select %p254, %s251, 15
        %s256 = smul.addr %s255, 2
        %s257 = smul.addr %s253, 32
        %s258 = sadd.s32 %s256, %s257
        %s259 = smul.addr %s258, 8
        %s260 = scalar_lea.vmem %s4, %s259
        %p261 = pneg %p147
        %p262 = pneg %p144
        %p263 = pneg %p175
        %p264 = pneg %p172
        %s265 = sand.u32 %s162, 1
        %s266 = scalar_lea.sflag [#allocation3], %s265
        %s267 = sand.u32 %s162, 1
        %s268 = smul.addr %s267, 128
        %s269 = scalar_lea.vmem [#allocation2], %s268
        %s270 = smul.u32 %s23, 2
        %s271 = sadd.s32 %s270, %s24
        %p272 = scmp.lt.s32.totalorder %s271, 3
        %s273 = scalar_select %p272, %s271, 3
        %s274 = smul.addr %s273, 36
        %s275 = smul.addr %s274, 8
        %s276 = scalar_lea.vmem %s0, %s275
        %s277 = smul.u32 %s23, 2
        %s278 = sadd.s32 %s277, %s24
        %s279 = smul.u32 8, %s24
        %p280 = scmp.lt.s32.totalorder %s23, 1
        %s281 = scalar_select %p280, %s23, 1
        %p282 = scmp.lt.s32.totalorder %s279, 15
        %s283 = scalar_select %p282, %s279, 15
        %s284 = smul.addr %s283, 2
        %s285 = smul.addr %s281, 32
        %s286 = sadd.s32 %s284, %s285
        %s287 = smul.addr %s286, 8
        %s288 = scalar_lea.vmem %s4, %s287
        %s289 = smul.u32 8, %s24
        %s290 = smul.u32 8, %s24
        %v291 = vld [vmem:[%s276] sm:$0xff]
        %v292 = vld [vmem:[%s276 + $0x8] sm:$0xff]
        %v293 = vld [vmem:[%s276 + $0x18] sm:$0xff]
        %v294 = vld [vmem:[%s276 + $0x20] sm:$0xff]
        %v295 = vld [vmem:[%s276 + $0x30] sm:$0xff]
        %v296 = vld [vmem:[%s276 + $0x38] sm:$0xff]
        %v297 = vld [vmem:[%s276 + $0x48] sm:$0xff]
        %v298 = vld [vmem:[%s276 + $0x50] sm:$0xff]
        %v299 = vld [vmem:[%s276 + $0x60] sm:$0xff]
        %v300 = vld [vmem:[%s276 + $0x68] sm:$0xff]
        %v301 = vld [vmem:[%s276 + $0x78] sm:$0xff]
        %v302 = vld [vmem:[%s276 + $0x80] sm:$0xff]
        %v303 = vld [vmem:[%s276 + $0x90] sm:$0xff]
        %v304 = vld [vmem:[%s276 + $0x98] sm:$0xff]
        %v305 = vld [vmem:[%s276 + $0xa8] sm:$0xff]
        %v306 = vld [vmem:[%s276 + $0xb0] sm:$0xff]
        %v307 = vld [vmem:[%s1] sm:$0x1]
        %v309 = vlaneseq
        %v310 = vshrl.u32 %v309, 7
        %v311 = vsub.s32 0, %v310
        %v312 = vrot.slane %v307, %v311
        %v314 = vmul.f32 %v291, %v312
        %v315 = vmul.f32 %v292, %v312
        %v316 = vmul.f32 %v293, %v312
        %v317 = vmul.f32 %v294, %v312
        %v318 = vmul.f32 %v295, %v312
        %v319 = vmul.f32 %v296, %v312
        %v320 = vmul.f32 %v297, %v312
        %v321 = vmul.f32 %v298, %v312
        %v322 = vmul.f32 %v299, %v312
        %v323 = vmul.f32 %v300, %v312
        %v324 = vmul.f32 %v301, %v312
        %v325 = vmul.f32 %v302, %v312
        %v326 = vmul.f32 %v303, %v312
        %v327 = vmul.f32 %v304, %v312
        %v328 = vmul.f32 %v305, %v312
        %v329 = vmul.f32 %v306, %v312
        %v330 = vadd.f32 %v314, 0.0
        %v331 = vadd.f32 %v315, 0.0
        %v332 = vadd.f32 %v316, 0.0
        %v333 = vadd.f32 %v317, 0.0
        %v334 = vadd.f32 %v318, 0.0
        %v335 = vadd.f32 %v319, 0.0
        %v336 = vadd.f32 %v320, 0.0
        %v337 = vadd.f32 %v321, 0.0
        %v338 = vadd.f32 %v322, 0.0
        %v339 = vadd.f32 %v323, 0.0
        %v340 = vadd.f32 %v324, 0.0
        %v341 = vadd.f32 %v325, 0.0
        %v342 = vadd.f32 %v326, 0.0
        %v343 = vadd.f32 %v327, 0.0
        %v344 = vadd.f32 %v328, 0.0
        %v345 = vadd.f32 %v329, 0.0
        %v346 = vld [vmem:[%s276 + $0x1] sm:$0xff]
        %v347 = vld [vmem:[%s276 + $0x9] sm:$0xff]
        %v348 = vld [vmem:[%s276 + $0x19] sm:$0xff]
        %v349 = vld [vmem:[%s276 + $0x21] sm:$0xff]
        %v350 = vld [vmem:[%s276 + $0x31] sm:$0xff]
        %v351 = vld [vmem:[%s276 + $0x39] sm:$0xff]
        %v352 = vld [vmem:[%s276 + $0x49] sm:$0xff]
        %v353 = vld [vmem:[%s276 + $0x51] sm:$0xff]
        %v354 = vld [vmem:[%s276 + $0x61] sm:$0xff]
        %v355 = vld [vmem:[%s276 + $0x69] sm:$0xff]
        %v356 = vld [vmem:[%s276 + $0x79] sm:$0xff]
        %v357 = vld [vmem:[%s276 + $0x81] sm:$0xff]
        %v358 = vld [vmem:[%s276 + $0x91] sm:$0xff]
        %v359 = vld [vmem:[%s276 + $0x99] sm:$0xff]
        %v360 = vld [vmem:[%s276 + $0xa9] sm:$0xff]
        %v361 = vld [vmem:[%s276 + $0xb1] sm:$0xff]
        %s362 = scalar_lea.vmem %s1, 1
        %v363 = vld [vmem:[%s362] sm:$0x1]
        %v365 = vlaneseq
        %v366 = vshrl.u32 %v365, 7
        %v367 = vsub.s32 0, %v366
        %v368 = vrot.slane %v363, %v367
        %v370 = vmul.f32 %v346, %v368
        %v371 = vmul.f32 %v347, %v368
        %v372 = vmul.f32 %v348, %v368
        %v373 = vmul.f32 %v349, %v368
        %v374 = vmul.f32 %v350, %v368
        %v375 = vmul.f32 %v351, %v368
        %v376 = vmul.f32 %v352, %v368
        %v377 = vmul.f32 %v353, %v368
        %v378 = vmul.f32 %v354, %v368
        %v379 = vmul.f32 %v355, %v368
        %v380 = vmul.f32 %v356, %v368
        %v381 = vmul.f32 %v357, %v368
        %v382 = vmul.f32 %v358, %v368
        %v383 = vmul.f32 %v359, %v368
        %v384 = vmul.f32 %v360, %v368
        %v385 = vmul.f32 %v361, %v368
        %v386 = vadd.f32 %v330, %v370
        %v387 = vadd.f32 %v331, %v371
        %v388 = vadd.f32 %v332, %v372
        %v389 = vadd.f32 %v333, %v373
        %v390 = vadd.f32 %v334, %v374
        %v391 = vadd.f32 %v335, %v375
        %v392 = vadd.f32 %v336, %v376
        %v393 = vadd.f32 %v337, %v377
        %v394 = vadd.f32 %v338, %v378
        %v395 = vadd.f32 %v339, %v379
        %v396 = vadd.f32 %v340, %v380
        %v397 = vadd.f32 %v341, %v381
        %v398 = vadd.f32 %v342, %v382
        %v399 = vadd.f32 %v343, %v383
        %v400 = vadd.f32 %v344, %v384
        %v401 = vadd.f32 %v345, %v385
        %v402 = vld [vmem:[%s276 + $0x2] sm:$0xff]
        %v403 = vld [vmem:[%s276 + $0xa] sm:$0xff]
        %v404 = vld [vmem:[%s276 + $0x1a] sm:$0xff]
        %v405 = vld [vmem:[%s276 + $0x22] sm:$0xff]
        %v406 = vld [vmem:[%s276 + $0x32] sm:$0xff]
        %v407 = vld [vmem:[%s276 + $0x3a] sm:$0xff]
        %v408 = vld [vmem:[%s276 + $0x4a] sm:$0xff]
        %v409 = vld [vmem:[%s276 + $0x52] sm:$0xff]
        %v410 = vld [vmem:[%s276 + $0x62] sm:$0xff]
        %v411 = vld [vmem:[%s276 + $0x6a] sm:$0xff]
        %v412 = vld [vmem:[%s276 + $0x7a] sm:$0xff]
        %v413 = vld [vmem:[%s276 + $0x82] sm:$0xff]
        %v414 = vld [vmem:[%s276 + $0x92] sm:$0xff]
        %v415 = vld [vmem:[%s276 + $0x9a] sm:$0xff]
        %v416 = vld [vmem:[%s276 + $0xaa] sm:$0xff]
        %v417 = vld [vmem:[%s276 + $0xb2] sm:$0xff]
        %s418 = scalar_lea.vmem %s1, 2
        %v419 = vld [vmem:[%s418] sm:$0x1]
        %v421 = vlaneseq
        %v422 = vshrl.u32 %v421, 7
        %v423 = vsub.s32 0, %v422
        %v424 = vrot.slane %v419, %v423
        %v426 = vmul.f32 %v402, %v424
        %v427 = vmul.f32 %v403, %v424
        %v428 = vmul.f32 %v404, %v424
        %v429 = vmul.f32 %v405, %v424
        %v430 = vmul.f32 %v406, %v424
        %v431 = vmul.f32 %v407, %v424
        %v432 = vmul.f32 %v408, %v424
        %v433 = vmul.f32 %v409, %v424
        %v434 = vmul.f32 %v410, %v424
        %v435 = vmul.f32 %v411, %v424
        %v436 = vmul.f32 %v412, %v424
        %v437 = vmul.f32 %v413, %v424
        %v438 = vmul.f32 %v414, %v424
        %v439 = vmul.f32 %v415, %v424
        %v440 = vmul.f32 %v416, %v424
        %v441 = vmul.f32 %v417, %v424
        %v442 = vadd.f32 %v386, %v426
        %v443 = vadd.f32 %v387, %v427
        %v444 = vadd.f32 %v388, %v428
        %v445 = vadd.f32 %v389, %v429
        %v446 = vadd.f32 %v390, %v430
        %v447 = vadd.f32 %v391, %v431
        %v448 = vadd.f32 %v392, %v432
        %v449 = vadd.f32 %v393, %v433
        %v450 = vadd.f32 %v394, %v434
        %v451 = vadd.f32 %v395, %v435
        %v452 = vadd.f32 %v396, %v436
        %v453 = vadd.f32 %v397, %v437
        %v454 = vadd.f32 %v398, %v438
        %v455 = vadd.f32 %v399, %v439
        %v456 = vadd.f32 %v400, %v440
        %v457 = vadd.f32 %v401, %v441
        %v458 = vld [vmem:[%s276 + $0x3] sm:$0xff]
        %v459 = vld [vmem:[%s276 + $0xb] sm:$0xff]
        %v460 = vld [vmem:[%s276 + $0x1b] sm:$0xff]
        %v461 = vld [vmem:[%s276 + $0x23] sm:$0xff]
        %v462 = vld [vmem:[%s276 + $0x33] sm:$0xff]
        %v463 = vld [vmem:[%s276 + $0x3b] sm:$0xff]
        %v464 = vld [vmem:[%s276 + $0x4b] sm:$0xff]
        %v465 = vld [vmem:[%s276 + $0x53] sm:$0xff]
        %v466 = vld [vmem:[%s276 + $0x63] sm:$0xff]
        %v467 = vld [vmem:[%s276 + $0x6b] sm:$0xff]
        %v468 = vld [vmem:[%s276 + $0x7b] sm:$0xff]
        %v469 = vld [vmem:[%s276 + $0x83] sm:$0xff]
        %v470 = vld [vmem:[%s276 + $0x93] sm:$0xff]
        %v471 = vld [vmem:[%s276 + $0x9b] sm:$0xff]
        %v472 = vld [vmem:[%s276 + $0xab] sm:$0xff]
        %v473 = vld [vmem:[%s276 + $0xb3] sm:$0xff]
        %s474 = scalar_lea.vmem %s1, 3
        %v475 = vld [vmem:[%s474] sm:$0x1]
        %v477 = vlaneseq
        %v478 = vshrl.u32 %v477, 7
        %v479 = vsub.s32 0, %v478
        %v480 = vrot.slane %v475, %v479
        %v482 = vmul.f32 %v458, %v480
        %v483 = vmul.f32 %v459, %v480
        %v484 = vmul.f32 %v460, %v480
        %v485 = vmul.f32 %v461, %v480
        %v486 = vmul.f32 %v462, %v480
        %v487 = vmul.f32 %v463, %v480
        %v488 = vmul.f32 %v464, %v480
        %v489 = vmul.f32 %v465, %v480
        %v490 = vmul.f32 %v466, %v480
        %v491 = vmul.f32 %v467, %v480
        %v492 = vmul.f32 %v468, %v480
        %v493 = vmul.f32 %v469, %v480
        %v494 = vmul.f32 %v470, %v480
        %v495 = vmul.f32 %v471, %v480
        %v496 = vmul.f32 %v472, %v480
        %v497 = vmul.f32 %v473, %v480
        %v498 = vadd.f32 %v442, %v482
        %v499 = vadd.f32 %v443, %v483
        %v500 = vadd.f32 %v444, %v484
        %v501 = vadd.f32 %v445, %v485
        %v502 = vadd.f32 %v446, %v486
        %v503 = vadd.f32 %v447, %v487
        %v504 = vadd.f32 %v448, %v488
        %v505 = vadd.f32 %v449, %v489
        %v506 = vadd.f32 %v450, %v490
        %v507 = vadd.f32 %v451, %v491
        %v508 = vadd.f32 %v452, %v492
        %v509 = vadd.f32 %v453, %v493
        %v510 = vadd.f32 %v454, %v494
        %v511 = vadd.f32 %v455, %v495
        %v512 = vadd.f32 %v456, %v496
        %v513 = vadd.f32 %v457, %v497
        %v514 = vld [vmem:[%s276 + $0x4] sm:$0xff]
        %v515 = vld [vmem:[%s276 + $0xc] sm:$0xff]
        %v516 = vld [vmem:[%s276 + $0x1c] sm:$0xff]
        %v517 = vld [vmem:[%s276 + $0x24] sm:$0xff]
        %v518 = vld [vmem:[%s276 + $0x34] sm:$0xff]
        %v519 = vld [vmem:[%s276 + $0x3c] sm:$0xff]
        %v520 = vld [vmem:[%s276 + $0x4c] sm:$0xff]
        %v521 = vld [vmem:[%s276 + $0x54] sm:$0xff]
        %v522 = vld [vmem:[%s276 + $0x64] sm:$0xff]
        %v523 = vld [vmem:[%s276 + $0x6c] sm:$0xff]
        %v524 = vld [vmem:[%s276 + $0x7c] sm:$0xff]
        %v525 = vld [vmem:[%s276 + $0x84] sm:$0xff]
        %v526 = vld [vmem:[%s276 + $0x94] sm:$0xff]
        %v527 = vld [vmem:[%s276 + $0x9c] sm:$0xff]
        %v528 = vld [vmem:[%s276 + $0xac] sm:$0xff]
        %v529 = vld [vmem:[%s276 + $0xb4] sm:$0xff]
        %s530 = scalar_lea.vmem %s1, 4
        %v531 = vld [vmem:[%s530] sm:$0x1]
        %v533 = vlaneseq
        %v534 = vshrl.u32 %v533, 7
        %v535 = vsub.s32 0, %v534
        %v536 = vrot.slane %v531, %v535
        %v538 = vmul.f32 %v514, %v536
        %v539 = vmul.f32 %v515, %v536
        %v540 = vmul.f32 %v516, %v536
        %v541 = vmul.f32 %v517, %v536
        %v542 = vmul.f32 %v518, %v536
        %v543 = vmul.f32 %v519, %v536
        %v544 = vmul.f32 %v520, %v536
        %v545 = vmul.f32 %v521, %v536
        %v546 = vmul.f32 %v522, %v536
        %v547 = vmul.f32 %v523, %v536
        %v548 = vmul.f32 %v524, %v536
        %v549 = vmul.f32 %v525, %v536
        %v550 = vmul.f32 %v526, %v536
        %v551 = vmul.f32 %v527, %v536
        %v552 = vmul.f32 %v528, %v536
        %v553 = vmul.f32 %v529, %v536
        %v554 = vadd.f32 %v498, %v538
        %v555 = vadd.f32 %v499, %v539
        %v556 = vadd.f32 %v500, %v540
        %v557 = vadd.f32 %v501, %v541
        %v558 = vadd.f32 %v502, %v542
        %v559 = vadd.f32 %v503, %v543
        %v560 = vadd.f32 %v504, %v544
        %v561 = vadd.f32 %v505, %v545
        %v562 = vadd.f32 %v506, %v546
        %v563 = vadd.f32 %v507, %v547
        %v564 = vadd.f32 %v508, %v548
        %v565 = vadd.f32 %v509, %v549
        %v566 = vadd.f32 %v510, %v550
        %v567 = vadd.f32 %v511, %v551
        %v568 = vadd.f32 %v512, %v552
        %v569 = vadd.f32 %v513, %v553
        %s570 = scalar_lea.vmem %s276, 24
        %v571 = vld [vmem:[%s570] sm:$0xff]
        %v572 = vld [vmem:[%s570 + $0x8] sm:$0xff]
        %v573 = vld [vmem:[%s570 + $0x18] sm:$0xff]
        %v574 = vld [vmem:[%s570 + $0x20] sm:$0xff]
        %v575 = vld [vmem:[%s570 + $0x30] sm:$0xff]
        %v576 = vld [vmem:[%s570 + $0x38] sm:$0xff]
        %v577 = vld [vmem:[%s570 + $0x48] sm:$0xff]
        %v578 = vld [vmem:[%s570 + $0x50] sm:$0xff]
        %v579 = vld [vmem:[%s570 + $0x60] sm:$0xff]
        %v580 = vld [vmem:[%s570 + $0x68] sm:$0xff]
        %v581 = vld [vmem:[%s570 + $0x78] sm:$0xff]
        %v582 = vld [vmem:[%s570 + $0x80] sm:$0xff]
        %v583 = vld [vmem:[%s570 + $0x90] sm:$0xff]
        %v584 = vld [vmem:[%s570 + $0x98] sm:$0xff]
        %v585 = vld [vmem:[%s570 + $0xa8] sm:$0xff]
        %v586 = vld [vmem:[%s570 + $0xb0] sm:$0xff]
        %s587 = scalar_lea.vmem %s1, 5
        %v588 = vld [vmem:[%s587] sm:$0x1]
        %v590 = vlaneseq
        %v591 = vshrl.u32 %v590, 7
        %v592 = vsub.s32 0, %v591
        %v593 = vrot.slane %v588, %v592
        %v595 = vmul.f32 %v571, %v593
        %v596 = vmul.f32 %v572, %v593
        %v597 = vmul.f32 %v573, %v593
        %v598 = vmul.f32 %v574, %v593
        %v599 = vmul.f32 %v575, %v593
        %v600 = vmul.f32 %v576, %v593
        %v601 = vmul.f32 %v577, %v593
        %v602 = vmul.f32 %v578, %v593
        %v603 = vmul.f32 %v579, %v593
        %v604 = vmul.f32 %v580, %v593
        %v605 = vmul.f32 %v581, %v593
        %v606 = vmul.f32 %v582, %v593
        %v607 = vmul.f32 %v583, %v593
        %v608 = vmul.f32 %v584, %v593
        %v609 = vmul.f32 %v585, %v593
        %v610 = vmul.f32 %v586, %v593
        %v611 = vadd.f32 %v554, %v595
        %v612 = vadd.f32 %v555, %v596
        %v613 = vadd.f32 %v556, %v597
        %v614 = vadd.f32 %v557, %v598
        %v615 = vadd.f32 %v558, %v599
        %v616 = vadd.f32 %v559, %v600
        %v617 = vadd.f32 %v560, %v601
        %v618 = vadd.f32 %v561, %v602
        %v619 = vadd.f32 %v562, %v603
        %v620 = vadd.f32 %v563, %v604
        %v621 = vadd.f32 %v564, %v605
        %v622 = vadd.f32 %v565, %v606
        %v623 = vadd.f32 %v566, %v607
        %v624 = vadd.f32 %v567, %v608
        %v625 = vadd.f32 %v568, %v609
        %v626 = vadd.f32 %v569, %v610
        %v627 = vld [vmem:[%s570 + $0x1] sm:$0xff]
        %v628 = vld [vmem:[%s570 + $0x9] sm:$0xff]
        %v629 = vld [vmem:[%s570 + $0x19] sm:$0xff]
        %v630 = vld [vmem:[%s570 + $0x21] sm:$0xff]
        %v631 = vld [vmem:[%s570 + $0x31] sm:$0xff]
        %v632 = vld [vmem:[%s570 + $0x39] sm:$0xff]
        %v633 = vld [vmem:[%s570 + $0x49] sm:$0xff]
        %v634 = vld [vmem:[%s570 + $0x51] sm:$0xff]
        %v635 = vld [vmem:[%s570 + $0x61] sm:$0xff]
        %v636 = vld [vmem:[%s570 + $0x69] sm:$0xff]
        %v637 = vld [vmem:[%s570 + $0x79] sm:$0xff]
        %v638 = vld [vmem:[%s570 + $0x81] sm:$0xff]
        %v639 = vld [vmem:[%s570 + $0x91] sm:$0xff]
        %v640 = vld [vmem:[%s570 + $0x99] sm:$0xff]
        %v641 = vld [vmem:[%s570 + $0xa9] sm:$0xff]
        %v642 = vld [vmem:[%s570 + $0xb1] sm:$0xff]
        %s643 = scalar_lea.vmem %s1, 6
        %v644 = vld [vmem:[%s643] sm:$0x1]
        %v646 = vlaneseq
        %v647 = vshrl.u32 %v646, 7
        %v648 = vsub.s32 0, %v647
        %v649 = vrot.slane %v644, %v648
        %v651 = vmul.f32 %v627, %v649
        %v652 = vmul.f32 %v628, %v649
        %v653 = vmul.f32 %v629, %v649
        %v654 = vmul.f32 %v630, %v649
        %v655 = vmul.f32 %v631, %v649
        %v656 = vmul.f32 %v632, %v649
        %v657 = vmul.f32 %v633, %v649
        %v658 = vmul.f32 %v634, %v649
        %v659 = vmul.f32 %v635, %v649
        %v660 = vmul.f32 %v636, %v649
        %v661 = vmul.f32 %v637, %v649
        %v662 = vmul.f32 %v638, %v649
        %v663 = vmul.f32 %v639, %v649
        %v664 = vmul.f32 %v640, %v649
        %v665 = vmul.f32 %v641, %v649
        %v666 = vmul.f32 %v642, %v649
        %v667 = vadd.f32 %v611, %v651
        %v668 = vadd.f32 %v612, %v652
        %v669 = vadd.f32 %v613, %v653
        %v670 = vadd.f32 %v614, %v654
        %v671 = vadd.f32 %v615, %v655
        %v672 = vadd.f32 %v616, %v656
        %v673 = vadd.f32 %v617, %v657
        %v674 = vadd.f32 %v618, %v658
        %v675 = vadd.f32 %v619, %v659
        %v676 = vadd.f32 %v620, %v660
        %v677 = vadd.f32 %v621, %v661
        %v678 = vadd.f32 %v622, %v662
        %v679 = vadd.f32 %v623, %v663
        %v680 = vadd.f32 %v624, %v664
        %v681 = vadd.f32 %v625, %v665
        %v682 = vadd.f32 %v626, %v666
        %v683 = vld [vmem:[%s570 + $0x2] sm:$0xff]
        %v684 = vld [vmem:[%s570 + $0xa] sm:$0xff]
        %v685 = vld [vmem:[%s570 + $0x1a] sm:$0xff]
        %v686 = vld [vmem:[%s570 + $0x22] sm:$0xff]
        %v687 = vld [vmem:[%s570 + $0x32] sm:$0xff]
        %v688 = vld [vmem:[%s570 + $0x3a] sm:$0xff]
        %v689 = vld [vmem:[%s570 + $0x4a] sm:$0xff]
        %v690 = vld [vmem:[%s570 + $0x52] sm:$0xff]
        %v691 = vld [vmem:[%s570 + $0x62] sm:$0xff]
        %v692 = vld [vmem:[%s570 + $0x6a] sm:$0xff]
        %v693 = vld [vmem:[%s570 + $0x7a] sm:$0xff]
        %v694 = vld [vmem:[%s570 + $0x82] sm:$0xff]
        %v695 = vld [vmem:[%s570 + $0x92] sm:$0xff]
        %v696 = vld [vmem:[%s570 + $0x9a] sm:$0xff]
        %v697 = vld [vmem:[%s570 + $0xaa] sm:$0xff]
        %v698 = vld [vmem:[%s570 + $0xb2] sm:$0xff]
        %s699 = scalar_lea.vmem %s1, 7
        %v700 = vld [vmem:[%s699] sm:$0x1]
        %v702 = vlaneseq
        %v703 = vshrl.u32 %v702, 7
        %v704 = vsub.s32 0, %v703
        %v705 = vrot.slane %v700, %v704
        %v707 = vmul.f32 %v683, %v705
        %v708 = vmul.f32 %v684, %v705
        %v709 = vmul.f32 %v685, %v705
        %v710 = vmul.f32 %v686, %v705
        %v711 = vmul.f32 %v687, %v705
        %v712 = vmul.f32 %v688, %v705
        %v713 = vmul.f32 %v689, %v705
        %v714 = vmul.f32 %v690, %v705
        %v715 = vmul.f32 %v691, %v705
        %v716 = vmul.f32 %v692, %v705
        %v717 = vmul.f32 %v693, %v705
        %v718 = vmul.f32 %v694, %v705
        %v719 = vmul.f32 %v695, %v705
        %v720 = vmul.f32 %v696, %v705
        %v721 = vmul.f32 %v697, %v705
        %v722 = vmul.f32 %v698, %v705
        %v723 = vadd.f32 %v667, %v707
        %v724 = vadd.f32 %v668, %v708
        %v725 = vadd.f32 %v669, %v709
        %v726 = vadd.f32 %v670, %v710
        %v727 = vadd.f32 %v671, %v711
        %v728 = vadd.f32 %v672, %v712
        %v729 = vadd.f32 %v673, %v713
        %v730 = vadd.f32 %v674, %v714
        %v731 = vadd.f32 %v675, %v715
        %v732 = vadd.f32 %v676, %v716
        %v733 = vadd.f32 %v677, %v717
        %v734 = vadd.f32 %v678, %v718
        %v735 = vadd.f32 %v679, %v719
        %v736 = vadd.f32 %v680, %v720
        %v737 = vadd.f32 %v681, %v721
        %v738 = vadd.f32 %v682, %v722
        %v739 = vld [vmem:[%s570 + $0x3] sm:$0xff]
        %v740 = vld [vmem:[%s570 + $0xb] sm:$0xff]
        %v741 = vld [vmem:[%s570 + $0x1b] sm:$0xff]
        %v742 = vld [vmem:[%s570 + $0x23] sm:$0xff]
        %v743 = vld [vmem:[%s570 + $0x33] sm:$0xff]
        %v744 = vld [vmem:[%s570 + $0x3b] sm:$0xff]
        %v745 = vld [vmem:[%s570 + $0x4b] sm:$0xff]
        %v746 = vld [vmem:[%s570 + $0x53] sm:$0xff]
        %v747 = vld [vmem:[%s570 + $0x63] sm:$0xff]
        %v748 = vld [vmem:[%s570 + $0x6b] sm:$0xff]
        %v749 = vld [vmem:[%s570 + $0x7b] sm:$0xff]
        %v750 = vld [vmem:[%s570 + $0x83] sm:$0xff]
        %v751 = vld [vmem:[%s570 + $0x93] sm:$0xff]
        %v752 = vld [vmem:[%s570 + $0x9b] sm:$0xff]
        %v753 = vld [vmem:[%s570 + $0xab] sm:$0xff]
        %v754 = vld [vmem:[%s570 + $0xb3] sm:$0xff]
        %s755 = scalar_lea.vmem %s1, 8
        %v756 = vld [vmem:[%s755] sm:$0x1]
        %v758 = vlaneseq
        %v759 = vshrl.u32 %v758, 7
        %v760 = vsub.s32 0, %v759
        %v761 = vrot.slane %v756, %v760
        %v763 = vmul.f32 %v739, %v761
        %v764 = vmul.f32 %v740, %v761
        %v765 = vmul.f32 %v741, %v761
        %v766 = vmul.f32 %v742, %v761
        %v767 = vmul.f32 %v743, %v761
        %v768 = vmul.f32 %v744, %v761
        %v769 = vmul.f32 %v745, %v761
        %v770 = vmul.f32 %v746, %v761
        %v771 = vmul.f32 %v747, %v761
        %v772 = vmul.f32 %v748, %v761
        %v773 = vmul.f32 %v749, %v761
        %v774 = vmul.f32 %v750, %v761
        %v775 = vmul.f32 %v751, %v761
        %v776 = vmul.f32 %v752, %v761
        %v777 = vmul.f32 %v753, %v761
        %v778 = vmul.f32 %v754, %v761
        %v779 = vadd.f32 %v723, %v763
        %v780 = vadd.f32 %v724, %v764
        %v781 = vadd.f32 %v725, %v765
        %v782 = vadd.f32 %v726, %v766
        %v783 = vadd.f32 %v727, %v767
        %v784 = vadd.f32 %v728, %v768
        %v785 = vadd.f32 %v729, %v769
        %v786 = vadd.f32 %v730, %v770
        %v787 = vadd.f32 %v731, %v771
        %v788 = vadd.f32 %v732, %v772
        %v789 = vadd.f32 %v733, %v773
        %v790 = vadd.f32 %v734, %v774
        %v791 = vadd.f32 %v735, %v775
        %v792 = vadd.f32 %v736, %v776
        %v793 = vadd.f32 %v737, %v777
        %v794 = vadd.f32 %v738, %v778
        %v795 = vld [vmem:[%s570 + $0x4] sm:$0xff]
        %v796 = vld [vmem:[%s570 + $0xc] sm:$0xff]
        %v797 = vld [vmem:[%s570 + $0x1c] sm:$0xff]
        %v798 = vld [vmem:[%s570 + $0x24] sm:$0xff]
        %v799 = vld [vmem:[%s570 + $0x34] sm:$0xff]
        %v800 = vld [vmem:[%s570 + $0x3c] sm:$0xff]
        %v801 = vld [vmem:[%s570 + $0x4c] sm:$0xff]
        %v802 = vld [vmem:[%s570 + $0x54] sm:$0xff]
        %v803 = vld [vmem:[%s570 + $0x64] sm:$0xff]
        %v804 = vld [vmem:[%s570 + $0x6c] sm:$0xff]
        %v805 = vld [vmem:[%s570 + $0x7c] sm:$0xff]
        %v806 = vld [vmem:[%s570 + $0x84] sm:$0xff]
        %v807 = vld [vmem:[%s570 + $0x94] sm:$0xff]
        %v808 = vld [vmem:[%s570 + $0x9c] sm:$0xff]
        %v809 = vld [vmem:[%s570 + $0xac] sm:$0xff]
        %v810 = vld [vmem:[%s570 + $0xb4] sm:$0xff]
        %s811 = scalar_lea.vmem %s1, 9
        %v812 = vld [vmem:[%s811] sm:$0x1]
        %v814 = vlaneseq
        %v815 = vshrl.u32 %v814, 7
        %v816 = vsub.s32 0, %v815
        %v817 = vrot.slane %v812, %v816
        %v819 = vmul.f32 %v795, %v817
        %v820 = vmul.f32 %v796, %v817
        %v821 = vmul.f32 %v797, %v817
        %v822 = vmul.f32 %v798, %v817
        %v823 = vmul.f32 %v799, %v817
        %v824 = vmul.f32 %v800, %v817
        %v825 = vmul.f32 %v801, %v817
        %v826 = vmul.f32 %v802, %v817
        %v827 = vmul.f32 %v803, %v817
        %v828 = vmul.f32 %v804, %v817
        %v829 = vmul.f32 %v805, %v817
        %v830 = vmul.f32 %v806, %v817
        %v831 = vmul.f32 %v807, %v817
        %v832 = vmul.f32 %v808, %v817
        %v833 = vmul.f32 %v809, %v817
        %v834 = vmul.f32 %v810, %v817
        %v835 = vadd.f32 %v779, %v819
        %v836 = vadd.f32 %v780, %v820
        %v837 = vadd.f32 %v781, %v821
        %v838 = vadd.f32 %v782, %v822
        %v839 = vadd.f32 %v783, %v823
        %v840 = vadd.f32 %v784, %v824
        %v841 = vadd.f32 %v785, %v825
        %v842 = vadd.f32 %v786, %v826
        %v843 = vadd.f32 %v787, %v827
        %v844 = vadd.f32 %v788, %v828
        %v845 = vadd.f32 %v789, %v829
        %v846 = vadd.f32 %v790, %v830
        %v847 = vadd.f32 %v791, %v831
        %v848 = vadd.f32 %v792, %v832
        %v849 = vadd.f32 %v793, %v833
        %v850 = vadd.f32 %v794, %v834
        %s851 = scalar_lea.vmem %s276, 48
        %v852 = vld [vmem:[%s851] sm:$0xff]
        %v853 = vld [vmem:[%s851 + $0x8] sm:$0xff]
        %v854 = vld [vmem:[%s851 + $0x18] sm:$0xff]
        %v855 = vld [vmem:[%s851 + $0x20] sm:$0xff]
        %v856 = vld [vmem:[%s851 + $0x30] sm:$0xff]
        %v857 = vld [vmem:[%s851 + $0x38] sm:$0xff]
        %v858 = vld [vmem:[%s851 + $0x48] sm:$0xff]
        %v859 = vld [vmem:[%s851 + $0x50] sm:$0xff]
        %v860 = vld [vmem:[%s851 + $0x60] sm:$0xff]
        %v861 = vld [vmem:[%s851 + $0x68] sm:$0xff]
        %v862 = vld [vmem:[%s851 + $0x78] sm:$0xff]
        %v863 = vld [vmem:[%s851 + $0x80] sm:$0xff]
        %v864 = vld [vmem:[%s851 + $0x90] sm:$0xff]
        %v865 = vld [vmem:[%s851 + $0x98] sm:$0xff]
        %v866 = vld [vmem:[%s851 + $0xa8] sm:$0xff]
        %v867 = vld [vmem:[%s851 + $0xb0] sm:$0xff]
        %s868 = scalar_lea.vmem %s1, 10
        %v869 = vld [vmem:[%s868] sm:$0x1]
        %v871 = vlaneseq
        %v872 = vshrl.u32 %v871, 7
        %v873 = vsub.s32 0, %v872
        %v874 = vrot.slane %v869, %v873
        %v876 = vmul.f32 %v852, %v874
        %v877 = vmul.f32 %v853, %v874
        %v878 = vmul.f32 %v854, %v874
        %v879 = vmul.f32 %v855, %v874
        %v880 = vmul.f32 %v856, %v874
        %v881 = vmul.f32 %v857, %v874
        %v882 = vmul.f32 %v858, %v874
        %v883 = vmul.f32 %v859, %v874
        %v884 = vmul.f32 %v860, %v874
        %v885 = vmul.f32 %v861, %v874
        %v886 = vmul.f32 %v862, %v874
        %v887 = vmul.f32 %v863, %v874
        %v888 = vmul.f32 %v864, %v874
        %v889 = vmul.f32 %v865, %v874
        %v890 = vmul.f32 %v866, %v874
        %v891 = vmul.f32 %v867, %v874
        %v892 = vadd.f32 %v835, %v876
        %v893 = vadd.f32 %v836, %v877
        %v894 = vadd.f32 %v837, %v878
        %v895 = vadd.f32 %v838, %v879
        %v896 = vadd.f32 %v839, %v880
        %v897 = vadd.f32 %v840, %v881
        %v898 = vadd.f32 %v841, %v882
        %v899 = vadd.f32 %v842, %v883
        %v900 = vadd.f32 %v843, %v884
        %v901 = vadd.f32 %v844, %v885
        %v902 = vadd.f32 %v845, %v886
        %v903 = vadd.f32 %v846, %v887
        %v904 = vadd.f32 %v847, %v888
        %v905 = vadd.f32 %v848, %v889
        %v906 = vadd.f32 %v849, %v890
        %v907 = vadd.f32 %v850, %v891
        %v908 = vld [vmem:[%s851 + $0x1] sm:$0xff]
        %v909 = vld [vmem:[%s851 + $0x9] sm:$0xff]
        %v910 = vld [vmem:[%s851 + $0x19] sm:$0xff]
        %v911 = vld [vmem:[%s851 + $0x21] sm:$0xff]
        %v912 = vld [vmem:[%s851 + $0x31] sm:$0xff]
        %v913 = vld [vmem:[%s851 + $0x39] sm:$0xff]
        %v914 = vld [vmem:[%s851 + $0x49] sm:$0xff]
        %v915 = vld [vmem:[%s851 + $0x51] sm:$0xff]
        %v916 = vld [vmem:[%s851 + $0x61] sm:$0xff]
        %v917 = vld [vmem:[%s851 + $0x69] sm:$0xff]
        %v918 = vld [vmem:[%s851 + $0x79] sm:$0xff]
        %v919 = vld [vmem:[%s851 + $0x81] sm:$0xff]
        %v920 = vld [vmem:[%s851 + $0x91] sm:$0xff]
        %v921 = vld [vmem:[%s851 + $0x99] sm:$0xff]
        %v922 = vld [vmem:[%s851 + $0xa9] sm:$0xff]
        %v923 = vld [vmem:[%s851 + $0xb1] sm:$0xff]
        %s924 = scalar_lea.vmem %s1, 11
        %v925 = vld [vmem:[%s924] sm:$0x1]
        %v927 = vlaneseq
        %v928 = vshrl.u32 %v927, 7
        %v929 = vsub.s32 0, %v928
        %v930 = vrot.slane %v925, %v929
        %v932 = vmul.f32 %v908, %v930
        %v933 = vmul.f32 %v909, %v930
        %v934 = vmul.f32 %v910, %v930
        %v935 = vmul.f32 %v911, %v930
        %v936 = vmul.f32 %v912, %v930
        %v937 = vmul.f32 %v913, %v930
        %v938 = vmul.f32 %v914, %v930
        %v939 = vmul.f32 %v915, %v930
        %v940 = vmul.f32 %v916, %v930
        %v941 = vmul.f32 %v917, %v930
        %v942 = vmul.f32 %v918, %v930
        %v943 = vmul.f32 %v919, %v930
        %v944 = vmul.f32 %v920, %v930
        %v945 = vmul.f32 %v921, %v930
        %v946 = vmul.f32 %v922, %v930
        %v947 = vmul.f32 %v923, %v930
        %v948 = vadd.f32 %v892, %v932
        %v949 = vadd.f32 %v893, %v933
        %v950 = vadd.f32 %v894, %v934
        %v951 = vadd.f32 %v895, %v935
        %v952 = vadd.f32 %v896, %v936
        %v953 = vadd.f32 %v897, %v937
        %v954 = vadd.f32 %v898, %v938
        %v955 = vadd.f32 %v899, %v939
        %v956 = vadd.f32 %v900, %v940
        %v957 = vadd.f32 %v901, %v941
        %v958 = vadd.f32 %v902, %v942
        %v959 = vadd.f32 %v903, %v943
        %v960 = vadd.f32 %v904, %v944
        %v961 = vadd.f32 %v905, %v945
        %v962 = vadd.f32 %v906, %v946
        %v963 = vadd.f32 %v907, %v947
        %v964 = vld [vmem:[%s851 + $0x2] sm:$0xff]
        %v965 = vld [vmem:[%s851 + $0xa] sm:$0xff]
        %v966 = vld [vmem:[%s851 + $0x1a] sm:$0xff]
        %v967 = vld [vmem:[%s851 + $0x22] sm:$0xff]
        %v968 = vld [vmem:[%s851 + $0x32] sm:$0xff]
        %v969 = vld [vmem:[%s851 + $0x3a] sm:$0xff]
        %v970 = vld [vmem:[%s851 + $0x4a] sm:$0xff]
        %v971 = vld [vmem:[%s851 + $0x52] sm:$0xff]
        %v972 = vld [vmem:[%s851 + $0x62] sm:$0xff]
        %v973 = vld [vmem:[%s851 + $0x6a] sm:$0xff]
        %v974 = vld [vmem:[%s851 + $0x7a] sm:$0xff]
        %v975 = vld [vmem:[%s851 + $0x82] sm:$0xff]
        %v976 = vld [vmem:[%s851 + $0x92] sm:$0xff]
        %v977 = vld [vmem:[%s851 + $0x9a] sm:$0xff]
        %v978 = vld [vmem:[%s851 + $0xaa] sm:$0xff]
        %v979 = vld [vmem:[%s851 + $0xb2] sm:$0xff]
        %s980 = scalar_lea.vmem %s1, 12
        %v981 = vld [vmem:[%s980] sm:$0x1]
        %v983 = vlaneseq
        %v984 = vshrl.u32 %v983, 7
        %v985 = vsub.s32 0, %v984
        %v986 = vrot.slane %v981, %v985
        %v988 = vmul.f32 %v964, %v986
        %v989 = vmul.f32 %v965, %v986
        %v990 = vmul.f32 %v966, %v986
        %v991 = vmul.f32 %v967, %v986
        %v992 = vmul.f32 %v968, %v986
        %v993 = vmul.f32 %v969, %v986
        %v994 = vmul.f32 %v970, %v986
        %v995 = vmul.f32 %v971, %v986
        %v996 = vmul.f32 %v972, %v986
        %v997 = vmul.f32 %v973, %v986
        %v998 = vmul.f32 %v974, %v986
        %v999 = vmul.f32 %v975, %v986
        %v1000 = vmul.f32 %v976, %v986
        %v1001 = vmul.f32 %v977, %v986
        %v1002 = vmul.f32 %v978, %v986
        %v1003 = vmul.f32 %v979, %v986
        %v1004 = vadd.f32 %v948, %v988
        %v1005 = vadd.f32 %v949, %v989
        %v1006 = vadd.f32 %v950, %v990
        %v1007 = vadd.f32 %v951, %v991
        %v1008 = vadd.f32 %v952, %v992
        %v1009 = vadd.f32 %v953, %v993
        %v1010 = vadd.f32 %v954, %v994
        %v1011 = vadd.f32 %v955, %v995
        %v1012 = vadd.f32 %v956, %v996
        %v1013 = vadd.f32 %v957, %v997
        %v1014 = vadd.f32 %v958, %v998
        %v1015 = vadd.f32 %v959, %v999
        %v1016 = vadd.f32 %v960, %v1000
        %v1017 = vadd.f32 %v961, %v1001
        %v1018 = vadd.f32 %v962, %v1002
        %v1019 = vadd.f32 %v963, %v1003
        %v1020 = vld [vmem:[%s851 + $0x3] sm:$0xff]
        %v1021 = vld [vmem:[%s851 + $0xb] sm:$0xff]
        %v1022 = vld [vmem:[%s851 + $0x1b] sm:$0xff]
        %v1023 = vld [vmem:[%s851 + $0x23] sm:$0xff]
        %v1024 = vld [vmem:[%s851 + $0x33] sm:$0xff]
        %v1025 = vld [vmem:[%s851 + $0x3b] sm:$0xff]
        %v1026 = vld [vmem:[%s851 + $0x4b] sm:$0xff]
        %v1027 = vld [vmem:[%s851 + $0x53] sm:$0xff]
        %v1028 = vld [vmem:[%s851 + $0x63] sm:$0xff]
        %v1029 = vld [vmem:[%s851 + $0x6b] sm:$0xff]
        %v1030 = vld [vmem:[%s851 + $0x7b] sm:$0xff]
        %v1031 = vld [vmem:[%s851 + $0x83] sm:$0xff]
        %v1032 = vld [vmem:[%s851 + $0x93] sm:$0xff]
        %v1033 = vld [vmem:[%s851 + $0x9b] sm:$0xff]
        %v1034 = vld [vmem:[%s851 + $0xab] sm:$0xff]
        %v1035 = vld [vmem:[%s851 + $0xb3] sm:$0xff]
        %s1036 = scalar_lea.vmem %s1, 13
        %v1037 = vld [vmem:[%s1036] sm:$0x1]
        %v1039 = vlaneseq
        %v1040 = vshrl.u32 %v1039, 7
        %v1041 = vsub.s32 0, %v1040
        %v1042 = vrot.slane %v1037, %v1041
        %v1044 = vmul.f32 %v1020, %v1042
        %v1045 = vmul.f32 %v1021, %v1042
        %v1046 = vmul.f32 %v1022, %v1042
        %v1047 = vmul.f32 %v1023, %v1042
        %v1048 = vmul.f32 %v1024, %v1042
        %v1049 = vmul.f32 %v1025, %v1042
        %v1050 = vmul.f32 %v1026, %v1042
        %v1051 = vmul.f32 %v1027, %v1042
        %v1052 = vmul.f32 %v1028, %v1042
        %v1053 = vmul.f32 %v1029, %v1042
        %v1054 = vmul.f32 %v1030, %v1042
        %v1055 = vmul.f32 %v1031, %v1042
        %v1056 = vmul.f32 %v1032, %v1042
        %v1057 = vmul.f32 %v1033, %v1042
        %v1058 = vmul.f32 %v1034, %v1042
        %v1059 = vmul.f32 %v1035, %v1042
        %v1060 = vadd.f32 %v1004, %v1044
        %v1061 = vadd.f32 %v1005, %v1045
        %v1062 = vadd.f32 %v1006, %v1046
        %v1063 = vadd.f32 %v1007, %v1047
        %v1064 = vadd.f32 %v1008, %v1048
        %v1065 = vadd.f32 %v1009, %v1049
        %v1066 = vadd.f32 %v1010, %v1050
        %v1067 = vadd.f32 %v1011, %v1051
        %v1068 = vadd.f32 %v1012, %v1052
        %v1069 = vadd.f32 %v1013, %v1053
        %v1070 = vadd.f32 %v1014, %v1054
        %v1071 = vadd.f32 %v1015, %v1055
        %v1072 = vadd.f32 %v1016, %v1056
        %v1073 = vadd.f32 %v1017, %v1057
        %v1074 = vadd.f32 %v1018, %v1058
        %v1075 = vadd.f32 %v1019, %v1059
        %v1076 = vld [vmem:[%s851 + $0x4] sm:$0xff]
        %v1077 = vld [vmem:[%s851 + $0xc] sm:$0xff]
        %v1078 = vld [vmem:[%s851 + $0x1c] sm:$0xff]
        %v1079 = vld [vmem:[%s851 + $0x24] sm:$0xff]
        %v1080 = vld [vmem:[%s851 + $0x34] sm:$0xff]
        %v1081 = vld [vmem:[%s851 + $0x3c] sm:$0xff]
        %v1082 = vld [vmem:[%s851 + $0x4c] sm:$0xff]
        %v1083 = vld [vmem:[%s851 + $0x54] sm:$0xff]
        %v1084 = vld [vmem:[%s851 + $0x64] sm:$0xff]
        %v1085 = vld [vmem:[%s851 + $0x6c] sm:$0xff]
        %v1086 = vld [vmem:[%s851 + $0x7c] sm:$0xff]
        %v1087 = vld [vmem:[%s851 + $0x84] sm:$0xff]
        %v1088 = vld [vmem:[%s851 + $0x94] sm:$0xff]
        %v1089 = vld [vmem:[%s851 + $0x9c] sm:$0xff]
        %v1090 = vld [vmem:[%s851 + $0xac] sm:$0xff]
        %v1091 = vld [vmem:[%s851 + $0xb4] sm:$0xff]
        %s1092 = scalar_lea.vmem %s1, 14
        %v1093 = vld [vmem:[%s1092] sm:$0x1]
        %v1095 = vlaneseq
        %v1096 = vshrl.u32 %v1095, 7
        %v1097 = vsub.s32 0, %v1096
        %v1098 = vrot.slane %v1093, %v1097
        %v1100 = vmul.f32 %v1076, %v1098
        %v1101 = vmul.f32 %v1077, %v1098
        %v1102 = vmul.f32 %v1078, %v1098
        %v1103 = vmul.f32 %v1079, %v1098
        %v1104 = vmul.f32 %v1080, %v1098
        %v1105 = vmul.f32 %v1081, %v1098
        %v1106 = vmul.f32 %v1082, %v1098
        %v1107 = vmul.f32 %v1083, %v1098
        %v1108 = vmul.f32 %v1084, %v1098
        %v1109 = vmul.f32 %v1085, %v1098
        %v1110 = vmul.f32 %v1086, %v1098
        %v1111 = vmul.f32 %v1087, %v1098
        %v1112 = vmul.f32 %v1088, %v1098
        %v1113 = vmul.f32 %v1089, %v1098
        %v1114 = vmul.f32 %v1090, %v1098
        %v1115 = vmul.f32 %v1091, %v1098
        %v1116 = vadd.f32 %v1060, %v1100
        %v1117 = vadd.f32 %v1061, %v1101
        %v1118 = vadd.f32 %v1062, %v1102
        %v1119 = vadd.f32 %v1063, %v1103
        %v1120 = vadd.f32 %v1064, %v1104
        %v1121 = vadd.f32 %v1065, %v1105
        %v1122 = vadd.f32 %v1066, %v1106
        %v1123 = vadd.f32 %v1067, %v1107
        %v1124 = vadd.f32 %v1068, %v1108
        %v1125 = vadd.f32 %v1069, %v1109
        %v1126 = vadd.f32 %v1070, %v1110
        %v1127 = vadd.f32 %v1071, %v1111
        %v1128 = vadd.f32 %v1072, %v1112
        %v1129 = vadd.f32 %v1073, %v1113
        %v1130 = vadd.f32 %v1074, %v1114
        %v1131 = vadd.f32 %v1075, %v1115
        %s1132 = scalar_lea.vmem %s276, 72
        %v1133 = vld [vmem:[%s1132] sm:$0xff]
        %v1134 = vld [vmem:[%s1132 + $0x8] sm:$0xff]
        %v1135 = vld [vmem:[%s1132 + $0x18] sm:$0xff]
        %v1136 = vld [vmem:[%s1132 + $0x20] sm:$0xff]
        %v1137 = vld [vmem:[%s1132 + $0x30] sm:$0xff]
        %v1138 = vld [vmem:[%s1132 + $0x38] sm:$0xff]
        %v1139 = vld [vmem:[%s1132 + $0x48] sm:$0xff]
        %v1140 = vld [vmem:[%s1132 + $0x50] sm:$0xff]
        %v1141 = vld [vmem:[%s1132 + $0x60] sm:$0xff]
        %v1142 = vld [vmem:[%s1132 + $0x68] sm:$0xff]
        %v1143 = vld [vmem:[%s1132 + $0x78] sm:$0xff]
        %v1144 = vld [vmem:[%s1132 + $0x80] sm:$0xff]
        %v1145 = vld [vmem:[%s1132 + $0x90] sm:$0xff]
        %v1146 = vld [vmem:[%s1132 + $0x98] sm:$0xff]
        %v1147 = vld [vmem:[%s1132 + $0xa8] sm:$0xff]
        %v1148 = vld [vmem:[%s1132 + $0xb0] sm:$0xff]
        %s1149 = scalar_lea.vmem %s1, 15
        %v1150 = vld [vmem:[%s1149] sm:$0x1]
        %v1152 = vlaneseq
        %v1153 = vshrl.u32 %v1152, 7
        %v1154 = vsub.s32 0, %v1153
        %v1155 = vrot.slane %v1150, %v1154
        %v1157 = vmul.f32 %v1133, %v1155
        %v1158 = vmul.f32 %v1134, %v1155
        %v1159 = vmul.f32 %v1135, %v1155
        %v1160 = vmul.f32 %v1136, %v1155
        %v1161 = vmul.f32 %v1137, %v1155
        %v1162 = vmul.f32 %v1138, %v1155
        %v1163 = vmul.f32 %v1139, %v1155
        %v1164 = vmul.f32 %v1140, %v1155
        %v1165 = vmul.f32 %v1141, %v1155
        %v1166 = vmul.f32 %v1142, %v1155
        %v1167 = vmul.f32 %v1143, %v1155
        %v1168 = vmul.f32 %v1144, %v1155
        %v1169 = vmul.f32 %v1145, %v1155
        %v1170 = vmul.f32 %v1146, %v1155
        %v1171 = vmul.f32 %v1147, %v1155
        %v1172 = vmul.f32 %v1148, %v1155
        %v1173 = vadd.f32 %v1116, %v1157
        %v1174 = vadd.f32 %v1117, %v1158
        %v1175 = vadd.f32 %v1118, %v1159
        %v1176 = vadd.f32 %v1119, %v1160
        %v1177 = vadd.f32 %v1120, %v1161
        %v1178 = vadd.f32 %v1121, %v1162
        %v1179 = vadd.f32 %v1122, %v1163
        %v1180 = vadd.f32 %v1123, %v1164
        %v1181 = vadd.f32 %v1124, %v1165
        %v1182 = vadd.f32 %v1125, %v1166
        %v1183 = vadd.f32 %v1126, %v1167
        %v1184 = vadd.f32 %v1127, %v1168
        %v1185 = vadd.f32 %v1128, %v1169
        %v1186 = vadd.f32 %v1129, %v1170
        %v1187 = vadd.f32 %v1130, %v1171
        %v1188 = vadd.f32 %v1131, %v1172
        %v1189 = vld [vmem:[%s1132 + $0x1] sm:$0xff]
        %v1190 = vld [vmem:[%s1132 + $0x9] sm:$0xff]
        %v1191 = vld [vmem:[%s1132 + $0x19] sm:$0xff]
        %v1192 = vld [vmem:[%s1132 + $0x21] sm:$0xff]
        %v1193 = vld [vmem:[%s1132 + $0x31] sm:$0xff]
        %v1194 = vld [vmem:[%s1132 + $0x39] sm:$0xff]
        %v1195 = vld [vmem:[%s1132 + $0x49] sm:$0xff]
        %v1196 = vld [vmem:[%s1132 + $0x51] sm:$0xff]
        %v1197 = vld [vmem:[%s1132 + $0x61] sm:$0xff]
        %v1198 = vld [vmem:[%s1132 + $0x69] sm:$0xff]
        %v1199 = vld [vmem:[%s1132 + $0x79] sm:$0xff]
        %v1200 = vld [vmem:[%s1132 + $0x81] sm:$0xff]
        %v1201 = vld [vmem:[%s1132 + $0x91] sm:$0xff]
        %v1202 = vld [vmem:[%s1132 + $0x99] sm:$0xff]
        %v1203 = vld [vmem:[%s1132 + $0xa9] sm:$0xff]
        %v1204 = vld [vmem:[%s1132 + $0xb1] sm:$0xff]
        %s1205 = scalar_lea.vmem %s1, 16
        %v1206 = vld [vmem:[%s1205] sm:$0x1]
        %v1208 = vlaneseq
        %v1209 = vshrl.u32 %v1208, 7
        %v1210 = vsub.s32 0, %v1209
        %v1211 = vrot.slane %v1206, %v1210
        %v1213 = vmul.f32 %v1189, %v1211
        %v1214 = vmul.f32 %v1190, %v1211
        %v1215 = vmul.f32 %v1191, %v1211
        %v1216 = vmul.f32 %v1192, %v1211
        %v1217 = vmul.f32 %v1193, %v1211
        %v1218 = vmul.f32 %v1194, %v1211
        %v1219 = vmul.f32 %v1195, %v1211
        %v1220 = vmul.f32 %v1196, %v1211
        %v1221 = vmul.f32 %v1197, %v1211
        %v1222 = vmul.f32 %v1198, %v1211
        %v1223 = vmul.f32 %v1199, %v1211
        %v1224 = vmul.f32 %v1200, %v1211
        %v1225 = vmul.f32 %v1201, %v1211
        %v1226 = vmul.f32 %v1202, %v1211
        %v1227 = vmul.f32 %v1203, %v1211
        %v1228 = vmul.f32 %v1204, %v1211
        %v1229 = vadd.f32 %v1173, %v1213
        %v1230 = vadd.f32 %v1174, %v1214
        %v1231 = vadd.f32 %v1175, %v1215
        %v1232 = vadd.f32 %v1176, %v1216
        %v1233 = vadd.f32 %v1177, %v1217
        %v1234 = vadd.f32 %v1178, %v1218
        %v1235 = vadd.f32 %v1179, %v1219
        %v1236 = vadd.f32 %v1180, %v1220
        %v1237 = vadd.f32 %v1181, %v1221
        %v1238 = vadd.f32 %v1182, %v1222
        %v1239 = vadd.f32 %v1183, %v1223
        %v1240 = vadd.f32 %v1184, %v1224
        %v1241 = vadd.f32 %v1185, %v1225
        %v1242 = vadd.f32 %v1186, %v1226
        %v1243 = vadd.f32 %v1187, %v1227
        %v1244 = vadd.f32 %v1188, %v1228
        %v1245 = vld [vmem:[%s1132 + $0x2] sm:$0xff]
        %v1246 = vld [vmem:[%s1132 + $0xa] sm:$0xff]
        %v1247 = vld [vmem:[%s1132 + $0x1a] sm:$0xff]
        %v1248 = vld [vmem:[%s1132 + $0x22] sm:$0xff]
        %v1249 = vld [vmem:[%s1132 + $0x32] sm:$0xff]
        %v1250 = vld [vmem:[%s1132 + $0x3a] sm:$0xff]
        %v1251 = vld [vmem:[%s1132 + $0x4a] sm:$0xff]
        %v1252 = vld [vmem:[%s1132 + $0x52] sm:$0xff]
        %v1253 = vld [vmem:[%s1132 + $0x62] sm:$0xff]
        %v1254 = vld [vmem:[%s1132 + $0x6a] sm:$0xff]
        %v1255 = vld [vmem:[%s1132 + $0x7a] sm:$0xff]
        %v1256 = vld [vmem:[%s1132 + $0x82] sm:$0xff]
        %v1257 = vld [vmem:[%s1132 + $0x92] sm:$0xff]
        %v1258 = vld [vmem:[%s1132 + $0x9a] sm:$0xff]
        %v1259 = vld [vmem:[%s1132 + $0xaa] sm:$0xff]
        %v1260 = vld [vmem:[%s1132 + $0xb2] sm:$0xff]
        %s1261 = scalar_lea.vmem %s1, 17
        %v1262 = vld [vmem:[%s1261] sm:$0x1]
        %v1264 = vlaneseq
        %v1265 = vshrl.u32 %v1264, 7
        %v1266 = vsub.s32 0, %v1265
        %v1267 = vrot.slane %v1262, %v1266
        %v1269 = vmul.f32 %v1245, %v1267
        %v1270 = vmul.f32 %v1246, %v1267
        %v1271 = vmul.f32 %v1247, %v1267
        %v1272 = vmul.f32 %v1248, %v1267
        %v1273 = vmul.f32 %v1249, %v1267
        %v1274 = vmul.f32 %v1250, %v1267
        %v1275 = vmul.f32 %v1251, %v1267
        %v1276 = vmul.f32 %v1252, %v1267
        %v1277 = vmul.f32 %v1253, %v1267
        %v1278 = vmul.f32 %v1254, %v1267
        %v1279 = vmul.f32 %v1255, %v1267
        %v1280 = vmul.f32 %v1256, %v1267
        %v1281 = vmul.f32 %v1257, %v1267
        %v1282 = vmul.f32 %v1258, %v1267
        %v1283 = vmul.f32 %v1259, %v1267
        %v1284 = vmul.f32 %v1260, %v1267
        %v1285 = vadd.f32 %v1229, %v1269
        %v1286 = vadd.f32 %v1230, %v1270
        %v1287 = vadd.f32 %v1231, %v1271
        %v1288 = vadd.f32 %v1232, %v1272
        %v1289 = vadd.f32 %v1233, %v1273
        %v1290 = vadd.f32 %v1234, %v1274
        %v1291 = vadd.f32 %v1235, %v1275
        %v1292 = vadd.f32 %v1236, %v1276
        %v1293 = vadd.f32 %v1237, %v1277
        %v1294 = vadd.f32 %v1238, %v1278
        %v1295 = vadd.f32 %v1239, %v1279
        %v1296 = vadd.f32 %v1240, %v1280
        %v1297 = vadd.f32 %v1241, %v1281
        %v1298 = vadd.f32 %v1242, %v1282
        %v1299 = vadd.f32 %v1243, %v1283
        %v1300 = vadd.f32 %v1244, %v1284
        %v1301 = vld [vmem:[%s1132 + $0x3] sm:$0xff]
        %v1302 = vld [vmem:[%s1132 + $0xb] sm:$0xff]
        %v1303 = vld [vmem:[%s1132 + $0x1b] sm:$0xff]
        %v1304 = vld [vmem:[%s1132 + $0x23] sm:$0xff]
        %v1305 = vld [vmem:[%s1132 + $0x33] sm:$0xff]
        %v1306 = vld [vmem:[%s1132 + $0x3b] sm:$0xff]
        %v1307 = vld [vmem:[%s1132 + $0x4b] sm:$0xff]
        %v1308 = vld [vmem:[%s1132 + $0x53] sm:$0xff]
        %v1309 = vld [vmem:[%s1132 + $0x63] sm:$0xff]
        %v1310 = vld [vmem:[%s1132 + $0x6b] sm:$0xff]
        %v1311 = vld [vmem:[%s1132 + $0x7b] sm:$0xff]
        %v1312 = vld [vmem:[%s1132 + $0x83] sm:$0xff]
        %v1313 = vld [vmem:[%s1132 + $0x93] sm:$0xff]
        %v1314 = vld [vmem:[%s1132 + $0x9b] sm:$0xff]
        %v1315 = vld [vmem:[%s1132 + $0xab] sm:$0xff]
        %v1316 = vld [vmem:[%s1132 + $0xb3] sm:$0xff]
        %s1317 = scalar_lea.vmem %s1, 18
        %v1318 = vld [vmem:[%s1317] sm:$0x1]
        %v1320 = vlaneseq
        %v1321 = vshrl.u32 %v1320, 7
        %v1322 = vsub.s32 0, %v1321
        %v1323 = vrot.slane %v1318, %v1322
        %v1325 = vmul.f32 %v1301, %v1323
        %v1326 = vmul.f32 %v1302, %v1323
        %v1327 = vmul.f32 %v1303, %v1323
        %v1328 = vmul.f32 %v1304, %v1323
        %v1329 = vmul.f32 %v1305, %v1323
        %v1330 = vmul.f32 %v1306, %v1323
        %v1331 = vmul.f32 %v1307, %v1323
        %v1332 = vmul.f32 %v1308, %v1323
        %v1333 = vmul.f32 %v1309, %v1323
        %v1334 = vmul.f32 %v1310, %v1323
        %v1335 = vmul.f32 %v1311, %v1323
        %v1336 = vmul.f32 %v1312, %v1323
        %v1337 = vmul.f32 %v1313, %v1323
        %v1338 = vmul.f32 %v1314, %v1323
        %v1339 = vmul.f32 %v1315, %v1323
        %v1340 = vmul.f32 %v1316, %v1323
        %v1341 = vadd.f32 %v1285, %v1325
        %v1342 = vadd.f32 %v1286, %v1326
        %v1343 = vadd.f32 %v1287, %v1327
        %v1344 = vadd.f32 %v1288, %v1328
        %v1345 = vadd.f32 %v1289, %v1329
        %v1346 = vadd.f32 %v1290, %v1330
        %v1347 = vadd.f32 %v1291, %v1331
        %v1348 = vadd.f32 %v1292, %v1332
        %v1349 = vadd.f32 %v1293, %v1333
        %v1350 = vadd.f32 %v1294, %v1334
        %v1351 = vadd.f32 %v1295, %v1335
        %v1352 = vadd.f32 %v1296, %v1336
        %v1353 = vadd.f32 %v1297, %v1337
        %v1354 = vadd.f32 %v1298, %v1338
        %v1355 = vadd.f32 %v1299, %v1339
        %v1356 = vadd.f32 %v1300, %v1340
        %v1357 = vld [vmem:[%s1132 + $0x4] sm:$0xff]
        %v1358 = vld [vmem:[%s1132 + $0xc] sm:$0xff]
        %v1359 = vld [vmem:[%s1132 + $0x1c] sm:$0xff]
        %v1360 = vld [vmem:[%s1132 + $0x24] sm:$0xff]
        %v1361 = vld [vmem:[%s1132 + $0x34] sm:$0xff]
        %v1362 = vld [vmem:[%s1132 + $0x3c] sm:$0xff]
        %v1363 = vld [vmem:[%s1132 + $0x4c] sm:$0xff]
        %v1364 = vld [vmem:[%s1132 + $0x54] sm:$0xff]
        %v1365 = vld [vmem:[%s1132 + $0x64] sm:$0xff]
        %v1366 = vld [vmem:[%s1132 + $0x6c] sm:$0xff]
        %v1367 = vld [vmem:[%s1132 + $0x7c] sm:$0xff]
        %v1368 = vld [vmem:[%s1132 + $0x84] sm:$0xff]
        %v1369 = vld [vmem:[%s1132 + $0x94] sm:$0xff]
        %v1370 = vld [vmem:[%s1132 + $0x9c] sm:$0xff]
        %v1371 = vld [vmem:[%s1132 + $0xac] sm:$0xff]
        %v1372 = vld [vmem:[%s1132 + $0xb4] sm:$0xff]
        %s1373 = scalar_lea.vmem %s1, 19
        %v1374 = vld [vmem:[%s1373] sm:$0x1]
        %v1376 = vlaneseq
        %v1377 = vshrl.u32 %v1376, 7
        %v1378 = vsub.s32 0, %v1377
        %v1379 = vrot.slane %v1374, %v1378
        %v1381 = vmul.f32 %v1357, %v1379
        %v1382 = vmul.f32 %v1358, %v1379
        %v1383 = vmul.f32 %v1359, %v1379
        %v1384 = vmul.f32 %v1360, %v1379
        %v1385 = vmul.f32 %v1361, %v1379
        %v1386 = vmul.f32 %v1362, %v1379
        %v1387 = vmul.f32 %v1363, %v1379
        %v1388 = vmul.f32 %v1364, %v1379
        %v1389 = vmul.f32 %v1365, %v1379
        %v1390 = vmul.f32 %v1366, %v1379
        %v1391 = vmul.f32 %v1367, %v1379
        %v1392 = vmul.f32 %v1368, %v1379
        %v1393 = vmul.f32 %v1369, %v1379
        %v1394 = vmul.f32 %v1370, %v1379
        %v1395 = vmul.f32 %v1371, %v1379
        %v1396 = vmul.f32 %v1372, %v1379
        %v1397 = vadd.f32 %v1341, %v1381
        %v1398 = vadd.f32 %v1342, %v1382
        %v1399 = vadd.f32 %v1343, %v1383
        %v1400 = vadd.f32 %v1344, %v1384
        %v1401 = vadd.f32 %v1345, %v1385
        %v1402 = vadd.f32 %v1346, %v1386
        %v1403 = vadd.f32 %v1347, %v1387
        %v1404 = vadd.f32 %v1348, %v1388
        %v1405 = vadd.f32 %v1349, %v1389
        %v1406 = vadd.f32 %v1350, %v1390
        %v1407 = vadd.f32 %v1351, %v1391
        %v1408 = vadd.f32 %v1352, %v1392
        %v1409 = vadd.f32 %v1353, %v1393
        %v1410 = vadd.f32 %v1354, %v1394
        %v1411 = vadd.f32 %v1355, %v1395
        %v1412 = vadd.f32 %v1356, %v1396
        %s1413 = scalar_lea.vmem %s276, 96
        %v1414 = vld [vmem:[%s1413] sm:$0xff]
        %v1415 = vld [vmem:[%s1413 + $0x8] sm:$0xff]
        %v1416 = vld [vmem:[%s1413 + $0x18] sm:$0xff]
        %v1417 = vld [vmem:[%s1413 + $0x20] sm:$0xff]
        %v1418 = vld [vmem:[%s1413 + $0x30] sm:$0xff]
        %v1419 = vld [vmem:[%s1413 + $0x38] sm:$0xff]
        %v1420 = vld [vmem:[%s1413 + $0x48] sm:$0xff]
        %v1421 = vld [vmem:[%s1413 + $0x50] sm:$0xff]
        %v1422 = vld [vmem:[%s1413 + $0x60] sm:$0xff]
        %v1423 = vld [vmem:[%s1413 + $0x68] sm:$0xff]
        %v1424 = vld [vmem:[%s1413 + $0x78] sm:$0xff]
        %v1425 = vld [vmem:[%s1413 + $0x80] sm:$0xff]
        %v1426 = vld [vmem:[%s1413 + $0x90] sm:$0xff]
        %v1427 = vld [vmem:[%s1413 + $0x98] sm:$0xff]
        %v1428 = vld [vmem:[%s1413 + $0xa8] sm:$0xff]
        %v1429 = vld [vmem:[%s1413 + $0xb0] sm:$0xff]
        %s1430 = scalar_lea.vmem %s1, 20
        %v1431 = vld [vmem:[%s1430] sm:$0x1]
        %v1433 = vlaneseq
        %v1434 = vshrl.u32 %v1433, 7
        %v1435 = vsub.s32 0, %v1434
        %v1436 = vrot.slane %v1431, %v1435
        %v1438 = vmul.f32 %v1414, %v1436
        %v1439 = vmul.f32 %v1415, %v1436
        %v1440 = vmul.f32 %v1416, %v1436
        %v1441 = vmul.f32 %v1417, %v1436
        %v1442 = vmul.f32 %v1418, %v1436
        %v1443 = vmul.f32 %v1419, %v1436
        %v1444 = vmul.f32 %v1420, %v1436
        %v1445 = vmul.f32 %v1421, %v1436
        %v1446 = vmul.f32 %v1422, %v1436
        %v1447 = vmul.f32 %v1423, %v1436
        %v1448 = vmul.f32 %v1424, %v1436
        %v1449 = vmul.f32 %v1425, %v1436
        %v1450 = vmul.f32 %v1426, %v1436
        %v1451 = vmul.f32 %v1427, %v1436
        %v1452 = vmul.f32 %v1428, %v1436
        %v1453 = vmul.f32 %v1429, %v1436
        %v1454 = vadd.f32 %v1397, %v1438
        %v1455 = vadd.f32 %v1398, %v1439
        %v1456 = vadd.f32 %v1399, %v1440
        %v1457 = vadd.f32 %v1400, %v1441
        %v1458 = vadd.f32 %v1401, %v1442
        %v1459 = vadd.f32 %v1402, %v1443
        %v1460 = vadd.f32 %v1403, %v1444
        %v1461 = vadd.f32 %v1404, %v1445
        %v1462 = vadd.f32 %v1405, %v1446
        %v1463 = vadd.f32 %v1406, %v1447
        %v1464 = vadd.f32 %v1407, %v1448
        %v1465 = vadd.f32 %v1408, %v1449
        %v1466 = vadd.f32 %v1409, %v1450
        %v1467 = vadd.f32 %v1410, %v1451
        %v1468 = vadd.f32 %v1411, %v1452
        %v1469 = vadd.f32 %v1412, %v1453
        %v1470 = vld [vmem:[%s1413 + $0x1] sm:$0xff]
        %v1471 = vld [vmem:[%s1413 + $0x9] sm:$0xff]
        %v1472 = vld [vmem:[%s1413 + $0x19] sm:$0xff]
        %v1473 = vld [vmem:[%s1413 + $0x21] sm:$0xff]
        %v1474 = vld [vmem:[%s1413 + $0x31] sm:$0xff]
        %v1475 = vld [vmem:[%s1413 + $0x39] sm:$0xff]
        %v1476 = vld [vmem:[%s1413 + $0x49] sm:$0xff]
        %v1477 = vld [vmem:[%s1413 + $0x51] sm:$0xff]
        %v1478 = vld [vmem:[%s1413 + $0x61] sm:$0xff]
        %v1479 = vld [vmem:[%s1413 + $0x69] sm:$0xff]
        %v1480 = vld [vmem:[%s1413 + $0x79] sm:$0xff]
        %v1481 = vld [vmem:[%s1413 + $0x81] sm:$0xff]
        %v1482 = vld [vmem:[%s1413 + $0x91] sm:$0xff]
        %v1483 = vld [vmem:[%s1413 + $0x99] sm:$0xff]
        %v1484 = vld [vmem:[%s1413 + $0xa9] sm:$0xff]
        %v1485 = vld [vmem:[%s1413 + $0xb1] sm:$0xff]
        %s1486 = scalar_lea.vmem %s1, 21
        %v1487 = vld [vmem:[%s1486] sm:$0x1]
        %v1489 = vlaneseq
        %v1490 = vshrl.u32 %v1489, 7
        %v1491 = vsub.s32 0, %v1490
        %v1492 = vrot.slane %v1487, %v1491
        %v1494 = vmul.f32 %v1470, %v1492
        %v1495 = vmul.f32 %v1471, %v1492
        %v1496 = vmul.f32 %v1472, %v1492
        %v1497 = vmul.f32 %v1473, %v1492
        %v1498 = vmul.f32 %v1474, %v1492
        %v1499 = vmul.f32 %v1475, %v1492
        %v1500 = vmul.f32 %v1476, %v1492
        %v1501 = vmul.f32 %v1477, %v1492
        %v1502 = vmul.f32 %v1478, %v1492
        %v1503 = vmul.f32 %v1479, %v1492
        %v1504 = vmul.f32 %v1480, %v1492
        %v1505 = vmul.f32 %v1481, %v1492
        %v1506 = vmul.f32 %v1482, %v1492
        %v1507 = vmul.f32 %v1483, %v1492
        %v1508 = vmul.f32 %v1484, %v1492
        %v1509 = vmul.f32 %v1485, %v1492
        %v1510 = vadd.f32 %v1454, %v1494
        %v1511 = vadd.f32 %v1455, %v1495
        %v1512 = vadd.f32 %v1456, %v1496
        %v1513 = vadd.f32 %v1457, %v1497
        %v1514 = vadd.f32 %v1458, %v1498
        %v1515 = vadd.f32 %v1459, %v1499
        %v1516 = vadd.f32 %v1460, %v1500
        %v1517 = vadd.f32 %v1461, %v1501
        %v1518 = vadd.f32 %v1462, %v1502
        %v1519 = vadd.f32 %v1463, %v1503
        %v1520 = vadd.f32 %v1464, %v1504
        %v1521 = vadd.f32 %v1465, %v1505
        %v1522 = vadd.f32 %v1466, %v1506
        %v1523 = vadd.f32 %v1467, %v1507
        %v1524 = vadd.f32 %v1468, %v1508
        %v1525 = vadd.f32 %v1469, %v1509
        %v1526 = vld [vmem:[%s1413 + $0x2] sm:$0xff]
        %v1527 = vld [vmem:[%s1413 + $0xa] sm:$0xff]
        %v1528 = vld [vmem:[%s1413 + $0x1a] sm:$0xff]
        %v1529 = vld [vmem:[%s1413 + $0x22] sm:$0xff]
        %v1530 = vld [vmem:[%s1413 + $0x32] sm:$0xff]
        %v1531 = vld [vmem:[%s1413 + $0x3a] sm:$0xff]
        %v1532 = vld [vmem:[%s1413 + $0x4a] sm:$0xff]
        %v1533 = vld [vmem:[%s1413 + $0x52] sm:$0xff]
        %v1534 = vld [vmem:[%s1413 + $0x62] sm:$0xff]
        %v1535 = vld [vmem:[%s1413 + $0x6a] sm:$0xff]
        %v1536 = vld [vmem:[%s1413 + $0x7a] sm:$0xff]
        %v1537 = vld [vmem:[%s1413 + $0x82] sm:$0xff]
        %v1538 = vld [vmem:[%s1413 + $0x92] sm:$0xff]
        %v1539 = vld [vmem:[%s1413 + $0x9a] sm:$0xff]
        %v1540 = vld [vmem:[%s1413 + $0xaa] sm:$0xff]
        %v1541 = vld [vmem:[%s1413 + $0xb2] sm:$0xff]
        %s1542 = scalar_lea.vmem %s1, 22
        %v1543 = vld [vmem:[%s1542] sm:$0x1]
        %v1545 = vlaneseq
        %v1546 = vshrl.u32 %v1545, 7
        %v1547 = vsub.s32 0, %v1546
        %v1548 = vrot.slane %v1543, %v1547
        %v1550 = vmul.f32 %v1526, %v1548
        %v1551 = vmul.f32 %v1527, %v1548
        %v1552 = vmul.f32 %v1528, %v1548
        %v1553 = vmul.f32 %v1529, %v1548
        %v1554 = vmul.f32 %v1530, %v1548
        %v1555 = vmul.f32 %v1531, %v1548
        %v1556 = vmul.f32 %v1532, %v1548
        %v1557 = vmul.f32 %v1533, %v1548
        %v1558 = vmul.f32 %v1534, %v1548
        %v1559 = vmul.f32 %v1535, %v1548
        %v1560 = vmul.f32 %v1536, %v1548
        %v1561 = vmul.f32 %v1537, %v1548
        %v1562 = vmul.f32 %v1538, %v1548
        %v1563 = vmul.f32 %v1539, %v1548
        %v1564 = vmul.f32 %v1540, %v1548
        %v1565 = vmul.f32 %v1541, %v1548
        %v1566 = vadd.f32 %v1510, %v1550
        %v1567 = vadd.f32 %v1511, %v1551
        %v1568 = vadd.f32 %v1512, %v1552
        %v1569 = vadd.f32 %v1513, %v1553
        %v1570 = vadd.f32 %v1514, %v1554
        %v1571 = vadd.f32 %v1515, %v1555
        %v1572 = vadd.f32 %v1516, %v1556
        %v1573 = vadd.f32 %v1517, %v1557
        %v1574 = vadd.f32 %v1518, %v1558
        %v1575 = vadd.f32 %v1519, %v1559
        %v1576 = vadd.f32 %v1520, %v1560
        %v1577 = vadd.f32 %v1521, %v1561
        %v1578 = vadd.f32 %v1522, %v1562
        %v1579 = vadd.f32 %v1523, %v1563
        %v1580 = vadd.f32 %v1524, %v1564
        %v1581 = vadd.f32 %v1525, %v1565
        %v1582 = vld [vmem:[%s1413 + $0x3] sm:$0xff]
        %v1583 = vld [vmem:[%s1413 + $0xb] sm:$0xff]
        %v1584 = vld [vmem:[%s1413 + $0x1b] sm:$0xff]
        %v1585 = vld [vmem:[%s1413 + $0x23] sm:$0xff]
        %v1586 = vld [vmem:[%s1413 + $0x33] sm:$0xff]
        %v1587 = vld [vmem:[%s1413 + $0x3b] sm:$0xff]
        %v1588 = vld [vmem:[%s1413 + $0x4b] sm:$0xff]
        %v1589 = vld [vmem:[%s1413 + $0x53] sm:$0xff]
        %v1590 = vld [vmem:[%s1413 + $0x63] sm:$0xff]
        %v1591 = vld [vmem:[%s1413 + $0x6b] sm:$0xff]
        %v1592 = vld [vmem:[%s1413 + $0x7b] sm:$0xff]
        %v1593 = vld [vmem:[%s1413 + $0x83] sm:$0xff]
        %v1594 = vld [vmem:[%s1413 + $0x93] sm:$0xff]
        %v1595 = vld [vmem:[%s1413 + $0x9b] sm:$0xff]
        %v1596 = vld [vmem:[%s1413 + $0xab] sm:$0xff]
        %v1597 = vld [vmem:[%s1413 + $0xb3] sm:$0xff]
        %s1598 = scalar_lea.vmem %s1, 23
        %v1599 = vld [vmem:[%s1598] sm:$0x1]
        %v1601 = vlaneseq
        %v1602 = vshrl.u32 %v1601, 7
        %v1603 = vsub.s32 0, %v1602
        %v1604 = vrot.slane %v1599, %v1603
        %v1606 = vmul.f32 %v1582, %v1604
        %v1607 = vmul.f32 %v1583, %v1604
        %v1608 = vmul.f32 %v1584, %v1604
        %v1609 = vmul.f32 %v1585, %v1604
        %v1610 = vmul.f32 %v1586, %v1604
        %v1611 = vmul.f32 %v1587, %v1604
        %v1612 = vmul.f32 %v1588, %v1604
        %v1613 = vmul.f32 %v1589, %v1604
        %v1614 = vmul.f32 %v1590, %v1604
        %v1615 = vmul.f32 %v1591, %v1604
        %v1616 = vmul.f32 %v1592, %v1604
        %v1617 = vmul.f32 %v1593, %v1604
        %v1618 = vmul.f32 %v1594, %v1604
        %v1619 = vmul.f32 %v1595, %v1604
        %v1620 = vmul.f32 %v1596, %v1604
        %v1621 = vmul.f32 %v1597, %v1604
        %v1622 = vadd.f32 %v1566, %v1606
        %v1623 = vadd.f32 %v1567, %v1607
        %v1624 = vadd.f32 %v1568, %v1608
        %v1625 = vadd.f32 %v1569, %v1609
        %v1626 = vadd.f32 %v1570, %v1610
        %v1627 = vadd.f32 %v1571, %v1611
        %v1628 = vadd.f32 %v1572, %v1612
        %v1629 = vadd.f32 %v1573, %v1613
        %v1630 = vadd.f32 %v1574, %v1614
        %v1631 = vadd.f32 %v1575, %v1615
        %v1632 = vadd.f32 %v1576, %v1616
        %v1633 = vadd.f32 %v1577, %v1617
        %v1634 = vadd.f32 %v1578, %v1618
        %v1635 = vadd.f32 %v1579, %v1619
        %v1636 = vadd.f32 %v1580, %v1620
        %v1637 = vadd.f32 %v1581, %v1621
        %v1638 = vld [vmem:[%s1413 + $0x4] sm:$0xff]
        %v1639 = vld [vmem:[%s1413 + $0xc] sm:$0xff]
        %v1640 = vld [vmem:[%s1413 + $0x1c] sm:$0xff]
        %v1641 = vld [vmem:[%s1413 + $0x24] sm:$0xff]
        %v1642 = vld [vmem:[%s1413 + $0x34] sm:$0xff]
        %v1643 = vld [vmem:[%s1413 + $0x3c] sm:$0xff]
        %v1644 = vld [vmem:[%s1413 + $0x4c] sm:$0xff]
        %v1645 = vld [vmem:[%s1413 + $0x54] sm:$0xff]
        %v1646 = vld [vmem:[%s1413 + $0x64] sm:$0xff]
        %v1647 = vld [vmem:[%s1413 + $0x6c] sm:$0xff]
        %v1648 = vld [vmem:[%s1413 + $0x7c] sm:$0xff]
        %v1649 = vld [vmem:[%s1413 + $0x84] sm:$0xff]
        %v1650 = vld [vmem:[%s1413 + $0x94] sm:$0xff]
        %v1651 = vld [vmem:[%s1413 + $0x9c] sm:$0xff]
        %v1652 = vld [vmem:[%s1413 + $0xac] sm:$0xff]
        %v1653 = vld [vmem:[%s1413 + $0xb4] sm:$0xff]
        %s1654 = scalar_lea.vmem %s1, 24
        %v1655 = vld [vmem:[%s1654] sm:$0x1]
        %v1657 = vlaneseq
        %v1658 = vshrl.u32 %v1657, 7
        %v1659 = vsub.s32 0, %v1658
        %v1660 = vrot.slane %v1655, %v1659
        %v1662 = vmul.f32 %v1638, %v1660
        %v1663 = vmul.f32 %v1639, %v1660
        %v1664 = vmul.f32 %v1640, %v1660
        %v1665 = vmul.f32 %v1641, %v1660
        %v1666 = vmul.f32 %v1642, %v1660
        %v1667 = vmul.f32 %v1643, %v1660
        %v1668 = vmul.f32 %v1644, %v1660
        %v1669 = vmul.f32 %v1645, %v1660
        %v1670 = vmul.f32 %v1646, %v1660
        %v1671 = vmul.f32 %v1647, %v1660
        %v1672 = vmul.f32 %v1648, %v1660
        %v1673 = vmul.f32 %v1649, %v1660
        %v1674 = vmul.f32 %v1650, %v1660
        %v1675 = vmul.f32 %v1651, %v1660
        %v1676 = vmul.f32 %v1652, %v1660
        %v1677 = vmul.f32 %v1653, %v1660
        %v1678 = vadd.f32 %v1622, %v1662
        %v1679 = vadd.f32 %v1623, %v1663
        %v1680 = vadd.f32 %v1624, %v1664
        %v1681 = vadd.f32 %v1625, %v1665
        %v1682 = vadd.f32 %v1626, %v1666
        %v1683 = vadd.f32 %v1627, %v1667
        %v1684 = vadd.f32 %v1628, %v1668
        %v1685 = vadd.f32 %v1629, %v1669
        %v1686 = vadd.f32 %v1630, %v1670
        %v1687 = vadd.f32 %v1631, %v1671
        %v1688 = vadd.f32 %v1632, %v1672
        %v1689 = vadd.f32 %v1633, %v1673
        %v1690 = vadd.f32 %v1634, %v1674
        %v1691 = vadd.f32 %v1635, %v1675
        %v1692 = vadd.f32 %v1636, %v1676
        %v1693 = vadd.f32 %v1637, %v1677
        %vm1694 = vcmp.ge.f32.partialorder %v1678, 0.0
        %vm1695 = vcmp.ge.f32.partialorder %v1679, 0.0
        %vm1696 = vcmp.ge.f32.partialorder %v1680, 0.0
        %vm1697 = vcmp.ge.f32.partialorder %v1681, 0.0
        %vm1698 = vcmp.ge.f32.partialorder %v1682, 0.0
        %vm1699 = vcmp.ge.f32.partialorder %v1683, 0.0
        %vm1700 = vcmp.ge.f32.partialorder %v1684, 0.0
        %vm1701 = vcmp.ge.f32.partialorder %v1685, 0.0
        %vm1702 = vcmp.ge.f32.partialorder %v1686, 0.0
        %vm1703 = vcmp.ge.f32.partialorder %v1687, 0.0
        %vm1704 = vcmp.ge.f32.partialorder %v1688, 0.0
        %vm1705 = vcmp.ge.f32.partialorder %v1689, 0.0
        %vm1706 = vcmp.ge.f32.partialorder %v1690, 0.0
        %vm1707 = vcmp.ge.f32.partialorder %v1691, 0.0
        %vm1708 = vcmp.ge.f32.partialorder %v1692, 0.0
        %vm1709 = vcmp.ge.f32.partialorder %v1693, 0.0
        %v1710 = vmul.f32 %v1678, 0.1
        %v1711 = vmul.f32 %v1679, 0.1
        %v1712 = vmul.f32 %v1680, 0.1
        %v1713 = vmul.f32 %v1681, 0.1
        %v1714 = vmul.f32 %v1682, 0.1
        %v1715 = vmul.f32 %v1683, 0.1
        %v1716 = vmul.f32 %v1684, 0.1
        %v1717 = vmul.f32 %v1685, 0.1
        %v1718 = vmul.f32 %v1686, 0.1
        %v1719 = vmul.f32 %v1687, 0.1
        %v1720 = vmul.f32 %v1688, 0.1
        %v1721 = vmul.f32 %v1689, 0.1
        %v1722 = vmul.f32 %v1690, 0.1
        %v1723 = vmul.f32 %v1691, 0.1
        %v1724 = vmul.f32 %v1692, 0.1
        %v1725 = vmul.f32 %v1693, 0.1
        %v1726 = vsel %vm1694, %v1678, %v1710
        %v1727 = vsel %vm1695, %v1679, %v1711
        %v1728 = vsel %vm1696, %v1680, %v1712
        %v1729 = vsel %vm1697, %v1681, %v1713
        %v1730 = vsel %vm1698, %v1682, %v1714
        %v1731 = vsel %vm1699, %v1683, %v1715
        %v1732 = vsel %vm1700, %v1684, %v1716
        %v1733 = vsel %vm1701, %v1685, %v1717
        %v1734 = vsel %vm1702, %v1686, %v1718
        %v1735 = vsel %vm1703, %v1687, %v1719
        %v1736 = vsel %vm1704, %v1688, %v1720
        %v1737 = vsel %vm1705, %v1689, %v1721
        %v1738 = vsel %vm1706, %v1690, %v1722
        %v1739 = vsel %vm1707, %v1691, %v1723
        %v1740 = vsel %vm1708, %v1692, %v1724
        %v1741 = vsel %vm1709, %v1693, %v1725
        %v1742 = vld [vmem:[%s2] sm:$0x1]
        %v1744 = vlaneseq
        %v1745 = vshrl.u32 %v1744, 7
        %v1746 = vsub.s32 0, %v1745
        %v1747 = vrot.slane %v1742, %v1746
        %v1749 = vmul.f32 %v1726, %v1747
        %v1750 = vmul.f32 %v1727, %v1747
        %v1751 = vmul.f32 %v1728, %v1747
        %v1752 = vmul.f32 %v1729, %v1747
        %v1753 = vmul.f32 %v1730, %v1747
        %v1754 = vmul.f32 %v1731, %v1747
        %v1755 = vmul.f32 %v1732, %v1747
        %v1756 = vmul.f32 %v1733, %v1747
        %v1757 = vmul.f32 %v1734, %v1747
        %v1758 = vmul.f32 %v1735, %v1747
        %v1759 = vmul.f32 %v1736, %v1747
        %v1760 = vmul.f32 %v1737, %v1747
        %v1761 = vmul.f32 %v1738, %v1747
        %v1762 = vmul.f32 %v1739, %v1747
        %v1763 = vmul.f32 %v1740, %v1747
        %v1764 = vmul.f32 %v1741, %v1747
        %v1765 = vld [vmem:[%s3] sm:$0x1]
        %v1767 = vlaneseq
        %v1768 = vshrl.u32 %v1767, 7
        %v1769 = vsub.s32 0, %v1768
        %v1770 = vrot.slane %v1765, %v1769
        %v1772 = vadd.f32 %v1749, %v1770
        %v1773 = vadd.f32 %v1750, %v1770
        %v1774 = vadd.f32 %v1751, %v1770
        %v1775 = vadd.f32 %v1752, %v1770
        %v1776 = vadd.f32 %v1753, %v1770
        %v1777 = vadd.f32 %v1754, %v1770
        %v1778 = vadd.f32 %v1755, %v1770
        %v1779 = vadd.f32 %v1756, %v1770
        %v1780 = vadd.f32 %v1757, %v1770
        %v1781 = vadd.f32 %v1758, %v1770
        %v1782 = vadd.f32 %v1759, %v1770
        %v1783 = vadd.f32 %v1760, %v1770
        %v1784 = vadd.f32 %v1761, %v1770
        %v1785 = vadd.f32 %v1762, %v1770
        %v1786 = vadd.f32 %v1763, %v1770
        %v1787 = vadd.f32 %v1764, %v1770
        %v1788 = vld [vmem:[%s288] sm:$0xff]
        %v1789 = vld [vmem:[%s288 + $0x8] sm:$0xff]
        %v1790 = vld [vmem:[%s288 + $0x10] sm:$0xff]
        %v1791 = vld [vmem:[%s288 + $0x18] sm:$0xff]
        %v1792 = vld [vmem:[%s288 + $0x20] sm:$0xff]
        %v1793 = vld [vmem:[%s288 + $0x28] sm:$0xff]
        %v1794 = vld [vmem:[%s288 + $0x30] sm:$0xff]
        %v1795 = vld [vmem:[%s288 + $0x38] sm:$0xff]
        %v1796 = vld [vmem:[%s288 + $0x40] sm:$0xff]
        %v1797 = vld [vmem:[%s288 + $0x48] sm:$0xff]
        %v1798 = vld [vmem:[%s288 + $0x50] sm:$0xff]
        %v1799 = vld [vmem:[%s288 + $0x58] sm:$0xff]
        %v1800 = vld [vmem:[%s288 + $0x60] sm:$0xff]
        %v1801 = vld [vmem:[%s288 + $0x68] sm:$0xff]
        %v1802 = vld [vmem:[%s288 + $0x70] sm:$0xff]
        %v1803 = vld [vmem:[%s288 + $0x78] sm:$0xff]
        %v1804 = vadd.f32 %v1772, %v1788
        %v1805 = vadd.f32 %v1773, %v1789
        %v1806 = vadd.f32 %v1774, %v1790
        %v1807 = vadd.f32 %v1775, %v1791
        %v1808 = vadd.f32 %v1776, %v1792
        %v1809 = vadd.f32 %v1777, %v1793
        %v1810 = vadd.f32 %v1778, %v1794
        %v1811 = vadd.f32 %v1779, %v1795
        %v1812 = vadd.f32 %v1780, %v1796
        %v1813 = vadd.f32 %v1781, %v1797
        %v1814 = vadd.f32 %v1782, %v1798
        %v1815 = vadd.f32 %v1783, %v1799
        %v1816 = vadd.f32 %v1784, %v1800
        %v1817 = vadd.f32 %v1785, %v1801
        %v1818 = vadd.f32 %v1786, %v1802
        %v1819 = vadd.f32 %v1787, %v1803
        %vm1820 = vcmask 261120
        %1821 = vst.msk [vmem:[%s269] sm:$0xff] %vm1820, %v1804
        %1822 = vst.msk [vmem:[%s269 + $0x8] sm:$0xff] %vm1820, %v1805
        %1823 = vst.msk [vmem:[%s269 + $0x10] sm:$0xff] %vm1820, %v1806
        %1824 = vst.msk [vmem:[%s269 + $0x18] sm:$0xff] %vm1820, %v1807
        %1825 = vst.msk [vmem:[%s269 + $0x20] sm:$0xff] %vm1820, %v1808
        %1826 = vst.msk [vmem:[%s269 + $0x28] sm:$0xff] %vm1820, %v1809
        %1827 = vst.msk [vmem:[%s269 + $0x30] sm:$0xff] %vm1820, %v1810
        %1828 = vst.msk [vmem:[%s269 + $0x38] sm:$0xff] %vm1820, %v1811
        %1829 = vst.msk [vmem:[%s269 + $0x40] sm:$0xff] %vm1820, %v1812
        %1830 = vst.msk [vmem:[%s269 + $0x48] sm:$0xff] %vm1820, %v1813
        %1831 = vst.msk [vmem:[%s269 + $0x50] sm:$0xff] %vm1820, %v1814
        %1832 = vst.msk [vmem:[%s269 + $0x58] sm:$0xff] %vm1820, %v1815
        %1833 = vst.msk [vmem:[%s269 + $0x60] sm:$0xff] %vm1820, %v1816
        %1834 = vst.msk [vmem:[%s269 + $0x68] sm:$0xff] %vm1820, %v1817
        %1835 = vst.msk [vmem:[%s269 + $0x70] sm:$0xff] %vm1820, %v1818
        %1836 = vst.msk [vmem:[%s269 + $0x78] sm:$0xff] %vm1820, %v1819
        %s1837 = sand.u32 %s162, 1
        %s1838 = scalar_lea.sflag [#allocation3], %s1837
        %s1839 = sand.u32 %s162, 1
        %s1840 = smul.addr %s1839, 128
        %s1841 = scalar_lea.vmem [#allocation2], %s1840
        // Predicated region
        $region41: #{tpu_custom_call.1} parent=39 // pred_check
          %p1842 = pneg %p172
        $region42: #{tpu_custom_call.1} parent=39 // pred_check_branch
          %1844 = sbr.rel (%p1842) target = $region44
        $region43: #{tpu_custom_call.1} parent=39 // pred_region
          %s1845 = smul.u32 8, %s24
          %s1847 = ssub.s32 2048, 2048
          %1848 = vsyncadd %s1838, %s1847
          %s1849 = smul.addr %s1845, 2
          %s1850 = smul.addr %s23, 32
          %s1851 = sadd.s32 %s1849, %s1850
          %s1852 = smul.addr %s1851, 128
          %s1853 = scalar_lea.hbm %s5, %s1852
          %s1854 = sshll.u32 %s1841, 4
          %s1855 = int_to_ptr.vmem [resolvable:$true] %s1854
          %1860 = dma.vmem_to_hbm [thread:$0]  %s1855, 2048, %s1853, %s1838, 128, 128, 8
        $region44: #{tpu_custom_call.1} parent=39 // pred_fallthru
          _
      $region40: #{tpu_custom_call.1} parent=5 // pred_fallthru
        _
      %p1861 = scmp.le.s32.totalorder 2, %s14
      // Predicated region
      $region45: #{tpu_custom_call.1} parent=5 // pred_check
        %p1862 = pneg %p1861
      $region46: #{tpu_custom_call.1} parent=5 // pred_check_branch
        %1864 = sbr.rel (%p1862) target = $region48
      $region47: #{tpu_custom_call.1} parent=5 // pred_region
        %s1865 = ssub.s32 %s14, 2
        // Predicated region
        $region49: #{tpu_custom_call.1} parent=47 // pred_check
          %p1866 = pneg %p178
        $region50: #{tpu_custom_call.1} parent=47 // pred_check_branch
          %1868 = sbr.rel (%p1866) target = $region52
        $region51: #{tpu_custom_call.1} parent=47 // pred_region
          %s1869 = sand.u32 %s163, 1
          %s1870 = scalar_lea.sflag [#allocation3], %s1869
          %s1871 = sand.u32 %s163, 1
          %s1872 = smul.addr %s1871, 128
          %s1873 = scalar_lea.vmem [#allocation2], %s1872
          %1874 = dma.done %s1870, 2048
        $region52: #{tpu_custom_call.1} parent=47 // pred_fallthru
          _
      $region48: #{tpu_custom_call.1} parent=5 // pred_fallthru
        _
    $region6: #{tpu_custom_call.1} parent=1 // loop_footer
      %s18 = sadd.s32 1, %s14
    $region7: #{tpu_custom_call.1} parent=1 // loop_footer_branch
      %13 = sbr.rel target = $region3
    $region8: #{tpu_custom_call.1} parent=1 // loop_exit
      _
    %1875 = vsyncpa [#allocation3], 1
    %s1876 = scalar_lea.sflag [#allocation3], 1
    %1877 = vsyncpa %s1876, 1

</llo_original>
